<compile_context>
chip_gen: v7x
topology: tpu7x:2x2x1
jax: 0.10.0
libtpu: 0.0.40
codegen_flags: <defaults>
</compile_context>

<pallas_src>
import math
import functools

import jax
import jax.numpy as jnp
from jax.experimental import pallas as pl
from jax.experimental.pallas import tpu as pltpu

LN_EPS = 1e-5  # PyTorch nn.LayerNorm default


# ----------------------------------------------------------------------------
# Kernel 1: fused ln1 -> causal MHA -> residual add -> ln2  (one batch / step)
# ----------------------------------------------------------------------------
def attn_block_kernel(x_ref, ln1g_ref, ln1b_ref, ln2g_ref, ln2b_ref,
                      wqkv_ref, bqkv_ref, wo_ref, bo_ref, out_ref, *, num_heads):
    x = x_ref[0]                                             # (S, H) f32
    S, H = x.shape
    hd = H // num_heads
    scale = 1.0 / math.sqrt(hd)

    # ---- ln1 (f32) --------------------------------------------------------
    mu = jnp.mean(x, axis=-1, keepdims=True)
    var = jnp.mean(jnp.square(x - mu), axis=-1, keepdims=True)
    xn = (x - mu) * jax.lax.rsqrt(var + LN_EPS) * ln1g_ref[...] + ln1b_ref[...]

    # ---- fused QKV projection: ONE (S,H)@(H,3H) MXU matmul (bf16, f32 acc) -
    qkv = jnp.dot(xn.astype(jnp.bfloat16), wqkv_ref[...],
                  preferred_element_type=jnp.float32) + bqkv_ref[...]   # (S, 3H)

    # ---- split into heads: static lane slices stacked on a major axis -----
    def heads(base, scl=None):
        z = jnp.stack([qkv[:, base + h * hd: base + (h + 1) * hd]
                       for h in range(num_heads)], axis=0)   # (nh, S, hd)
        if scl is not None:
            z = z * scl                                      # fold 1/sqrt(hd) into q
        return z.astype(jnp.bfloat16)

    q = heads(0, scale)
    k = heads(H)
    v = heads(2 * H)

    # ---- causal scores + softmax (f32) ------------------------------------
    s = jnp.einsum('nqd,nkd->nqk', q, k, preferred_element_type=jnp.float32)
    row = jax.lax.broadcasted_iota(jnp.int32, (S, S), 0)
    col = jax.lax.broadcasted_iota(jnp.int32, (S, S), 1)
    s = jnp.where((row >= col)[None], s, -1e30)
    m = jnp.max(s, axis=-1, keepdims=True)
    p = jnp.exp(s - m)
    p = p * pl.reciprocal(jnp.sum(p, axis=-1, keepdims=True), approx=True)

    # ---- attention output + head-batched output projection ----------------
    o = jnp.einsum('nqk,nkd->nqd', p.astype(jnp.bfloat16), v,
                   preferred_element_type=jnp.float32)       # (nh, S, hd)
    yh = jnp.einsum('nqd,ndh->nqh', o.astype(jnp.bfloat16), wo_ref[...],
                    preferred_element_type=jnp.float32)      # (nh, S, H)
    y = yh[0]
    for h in range(1, num_heads):                            # static, tiny accumulate
        y = y + yh[h]
    y = y + bo_ref[...]

    # ---- residual + ln2 (f32), written once -------------------------------
    x1 = x + y
    mu2 = jnp.mean(x1, axis=-1, keepdims=True)
    var2 = jnp.mean(jnp.square(x1 - mu2), axis=-1, keepdims=True)
    out_ref[0] = (x1 - mu2) * jax.lax.rsqrt(var2 + LN_EPS) * ln2g_ref[...] + ln2b_ref[...]


def fused_attn_block(x, ln1_g, ln1_b, ln2_g, ln2_b, wqkv, bqkv, wo_r, bo, num_heads):
    # TODO(synk): for large S, switch to a flash-style (B, S//tq, S//tkv) grid
    #             with online-softmax scratch and causal tile skipping; the
    #             whole-S-per-step layout here is sized for small sequences.
    B, S, H = x.shape
    hd = H // num_heads
    kern = functools.partial(attn_block_kernel, num_heads=num_heads)
    return pl.pallas_call(
        kern,
        out_shape=jax.ShapeDtypeStruct((B, S, H), jnp.float32),
        grid=(B,),
        in_specs=[pl.BlockSpec((1, S, H), lambda b: (b, 0, 0)),
                  pl.BlockSpec((1, H), lambda b: (0, 0)),
                  pl.BlockSpec((1, H), lambda b: (0, 0)),
                  pl.BlockSpec((1, H), lambda b: (0, 0)),
                  pl.BlockSpec((1, H), lambda b: (0, 0)),
                  pl.BlockSpec((H, 3 * H), lambda b: (0, 0)),
                  pl.BlockSpec((1, 3 * H), lambda b: (0, 0)),
                  pl.BlockSpec((num_heads, hd, H), lambda b: (0, 0, 0)),
                  pl.BlockSpec((1, H), lambda b: (0, 0))],
        out_specs=pl.BlockSpec((1, S, H), lambda b: (b, 0, 0)),
        compiler_params=pltpu.CompilerParams(dimension_semantics=("parallel",)),
    )(x, ln1_g, ln1_b, ln2_g, ln2_b, wqkv, bqkv, wo_r, bo)


# ----------------------------------------------------------------------------
# Kernel 2: capacity-limited expert FFN, one expert per grid step.
# Inputs are the k = T/E tokens already gathered for this expert.
# ----------------------------------------------------------------------------
def moe_expert_kernel(xg_ref, g_ref, w1_ref, b1_ref, w2_ref, b2_ref, y_ref):
    x = xg_ref[0].astype(jnp.bfloat16)                       # (k, H)
    h = jnp.dot(x, w1_ref[0], preferred_element_type=jnp.float32) + b1_ref[0]
    h = jnp.maximum(h, 0.0)                                  # ReLU (f32)
    y = jnp.dot(h.astype(jnp.bfloat16), w2_ref[0],
                preferred_element_type=jnp.float32) + b2_ref[0]
    y_ref[0] = g_ref[0] * y                                  # gate (k,1) * (k,H)


def moe_expert_ffn(xg, gate_w, w1, b1, w2, b2):
    E, k, H = xg.shape
    F = w1.shape[-1]
    return pl.pallas_call(
        moe_expert_kernel,
        out_shape=jax.ShapeDtypeStruct((E, k, H), jnp.float32),
        grid=(E,),
        in_specs=[pl.BlockSpec((1, k, H), lambda e: (e, 0, 0)),
                  pl.BlockSpec((1, k, 1), lambda e: (e, 0, 0)),
                  pl.BlockSpec((1, H, F), lambda e: (e, 0, 0)),
                  pl.BlockSpec((1, 1, F), lambda e: (e, 0, 0)),
                  pl.BlockSpec((1, F, H), lambda e: (e, 0, 0)),
                  pl.BlockSpec((1, 1, H), lambda e: (e, 0, 0))],
        out_specs=pl.BlockSpec((1, k, H), lambda e: (e, 0, 0)),
        compiler_params=pltpu.CompilerParams(dimension_semantics=("parallel",)),
    )(xg, gate_w, w1, b1, w2, b2)


# ----------------------------------------------------------------------------
# Full MoEBlock forward
# ----------------------------------------------------------------------------
def moe_block_forward(x, p, num_heads, num_experts):
    B, S, H = x.shape
    T = B * S
    hd = H // num_heads
    nh = num_heads

    # One-off layout plumbing / bf16 weight casts (outside the kernels).
    wqkv_b = p["wqkv"].astype(jnp.bfloat16)                  # (H, 3H)
    wo_r = p["wo"].reshape(nh, hd, H).astype(jnp.bfloat16)   # head-major rows
    w1_b = p["w1"].astype(jnp.bfloat16)
    w2_b = p["w2"].astype(jnp.bfloat16)

    # x2 = ln2(x + attn(ln1(x)))  -- single fused kernel, one HBM round trip.
    x2 = fused_attn_block(x, p["ln1_g"], p["ln1_b"], p["ln2_g"], p["ln2_b"],
                          wqkv_b, p["bqkv"], wo_r, p["bo"], num_heads)
    x2d = x2.reshape(T, H)

    # Expert-choice routing (capacity factor 1: k = T // E tokens per expert).
    # TODO(synk): top-k routing + token gather/scatter stays in plain JAX; an
    #             in-kernel scalar-prefetch DMA gather would avoid the XLA
    #             gather/scatter round trips at large T.
    k = T // num_experts
    logits = x2d @ p["w_gate"]                               # (T, E)
    probs = jax.nn.softmax(logits, axis=-1)
    G, I = jax.lax.top_k(probs.T, k)                         # (E, k) each

    # Capacity-limited expert compute in Pallas (independent of E).
    xg = jnp.take(x2d, I, axis=0)                            # (E, k, H)
    y_sel = moe_expert_ffn(xg, G[..., None], w1_b, p["b1"], w2_b, p["b2"])

    # Scatter-accumulate gated expert outputs onto the residual stream.
    out2d = x2d.at[I.reshape(-1)].add(y_sel.reshape(-1, H))
    cache = {"routing_probs": probs, "expert_weights": G, "token_assignments": I}
    return out2d.reshape(B, S, H), cache


# ----------------------------------------------------------------------------
# Pure-JAX f32 reference (same math) for a sanity check.
# ----------------------------------------------------------------------------
def reference_forward(x, p, num_heads, num_experts):
    B, S, H = x.shape
    hd = H // num_heads

    def ln(z, g, b):
        m = z.mean(-1, keepdims=True)
        v = jnp.mean(jnp.square(z - m), -1, keepdims=True)
        return (z - m) * jax.lax.rsqrt(v + LN_EPS) * g + b

    h1 = ln(x, p["ln1_g"], p["ln1_b"])
    qkv = h1 @ p["wqkv"] + p["bqkv"]
    q, k_, v_ = jnp.split(qkv, 3, axis=-1)

    def heads(z):
        return z.reshape(B, S, num_heads, hd).transpose(0, 2, 1, 3)

    q, k_, v_ = heads(q), heads(k_), heads(v_)
    sc = jnp.einsum("bhqd,bhkd->bhqk", q, k_) / math.sqrt(hd)
    mask = jnp.tril(jnp.ones((S, S), bool))
    sc = jnp.where(mask, sc, -1e30)
    attn = jax.nn.softmax(sc, axis=-1)
    o = jnp.einsum("bhqk,bhkd->bhqd", attn, v_).transpose(0, 2, 1, 3).reshape(B, S, H)
    y = o @ p["wo"] + p["bo"]
    x2 = ln(x + y, p["ln2_g"], p["ln2_b"])

    x2f = x2.reshape(B * S, H)
    T = B * S
    kcap = T // num_experts
    logits = x2f @ p["w_gate"]
    probs = jax.nn.softmax(logits, axis=-1)
    G, I = jax.lax.top_k(probs.T, kcap)                      # (E, kcap)
    gates = jnp.sum(jax.nn.one_hot(I, T, dtype=jnp.float32) * G[..., None], axis=1)
    yf = jnp.zeros_like(x2f)
    for e in range(num_experts):
        h = jnp.maximum(x2f @ p["w1"][e] + p["b1"][e], 0.0)
        ye = h @ p["w2"][e] + p["b2"][e]
        yf = yf + gates[e][:, None] * ye
    out = x2f + yf
    return out.reshape(B, S, H), None


if __name__ == "__main__":
    B, S, H = 2, 8, 32
    NUM_HEADS = 4
    NUM_EXPERTS = 4
    FFN = 64

    key = jax.random.PRNGKey(0)
    ks = jax.random.split(key, 12)

    def init(k_, shape, scale=0.02):
        return (scale * jax.random.normal(k_, shape)).astype(jnp.float32)

    params = {
        "ln1_g": jnp.ones((1, H), jnp.float32),
        "ln1_b": jnp.zeros((1, H), jnp.float32),
        "ln2_g": jnp.ones((1, H), jnp.float32),
        "ln2_b": jnp.zeros((1, H), jnp.float32),
        "wqkv": init(ks[0], (H, 3 * H)),
        "bqkv": init(ks[1], (1, 3 * H)),
        "wo": init(ks[2], (H, H)),
        "bo": init(ks[3], (1, H)),
        "w_gate": init(ks[4], (H, NUM_EXPERTS)),
        "w1": init(ks[5], (NUM_EXPERTS, H, FFN)),
        "b1": init(ks[6], (NUM_EXPERTS, 1, FFN)),
        "w2": init(ks[7], (NUM_EXPERTS, FFN, H)),
        "b2": init(ks[8], (NUM_EXPERTS, 1, H)),
    }

    x = jax.random.normal(ks[9], (B, S, H), dtype=jnp.float32)

    fwd = jax.jit(functools.partial(moe_block_forward,
                                    num_heads=NUM_HEADS, num_experts=NUM_EXPERTS))
    out, cache = fwd(x, params)
    out = jax.block_until_ready(out)

    ref, _ = reference_forward(x, params, NUM_HEADS, NUM_EXPERTS)
    assert out.shape == (B, S, H)
    assert bool(jnp.all(jnp.isfinite(out)))
    assert bool(jnp.allclose(out, ref, atol=2e-2, rtol=2e-2))
    print("KERNEL_OK")
</pallas_src>

<mosaic_0001>
module attributes {stable_mosaic.version = 11 : i64} {
  func.func @attn_block_kernel(%arg0: i32, %arg1: memref<1x8x32xf32, #tpu.memory_space<vmem>>, %arg2: memref<1x32xf32, #tpu.memory_space<vmem>>, %arg3: memref<1x32xf32, #tpu.memory_space<vmem>>, %arg4: memref<1x32xf32, #tpu.memory_space<vmem>>, %arg5: memref<1x32xf32, #tpu.memory_space<vmem>>, %arg6: memref<32x96xbf16, #tpu.memory_space<vmem>>, %arg7: memref<1x96xf32, #tpu.memory_space<vmem>>, %arg8: memref<4x8x32xbf16, #tpu.memory_space<vmem>>, %arg9: memref<1x32xf32, #tpu.memory_space<vmem>>, %arg10: memref<1x8x32xf32, #tpu.memory_space<vmem>>) attributes {dimension_semantics = [#tpu.dimension_semantics<parallel>], iteration_bounds = array<i64: 2>, scalar_prefetch = 0 : i64, scratch_operands = 0 : i64, tpu.core_type = #tpu.core_type<tc>, window_params = [{transform_indices = @transform_0, window_bounds = array<i64: 1, 8, 32>}, {pipeline_mode = #tpu.pipeline_mode<synchronous>, transform_indices = @transform_1, window_bounds = array<i64: 1, 32>}, {pipeline_mode = #tpu.pipeline_mode<synchronous>, transform_indices = @transform_2, window_bounds = array<i64: 1, 32>}, {pipeline_mode = #tpu.pipeline_mode<synchronous>, transform_indices = @transform_3, window_bounds = array<i64: 1, 32>}, {pipeline_mode = #tpu.pipeline_mode<synchronous>, transform_indices = @transform_4, window_bounds = array<i64: 1, 32>}, {pipeline_mode = #tpu.pipeline_mode<synchronous>, transform_indices = @transform_5, window_bounds = array<i64: 32, 96>}, {pipeline_mode = #tpu.pipeline_mode<synchronous>, transform_indices = @transform_6, window_bounds = array<i64: 1, 96>}, {pipeline_mode = #tpu.pipeline_mode<synchronous>, transform_indices = @transform_7, window_bounds = array<i64: 4, 8, 32>}, {pipeline_mode = #tpu.pipeline_mode<synchronous>, transform_indices = @transform_8, window_bounds = array<i64: 1, 32>}, {transform_indices = @transform_9, window_bounds = array<i64: 1, 8, 32>}]} {
    %c0 = arith.constant 0 : index
    %c0_0 = arith.constant 0 : index
    %c0_1 = arith.constant 0 : index
    %0 = vector.load %arg1[%c0, %c0_0, %c0_1] : memref<1x8x32xf32, #tpu.memory_space<vmem>>, vector<1x8x32xf32>
    %1 = vector.shape_cast %0 : vector<1x8x32xf32> to vector<8x32xf32>
    %cst = arith.constant dense<0.000000e+00> : vector<8xf32>
    %2 = vector.multi_reduction <add>, %1, %cst [1] : vector<8x32xf32> to vector<8xf32>
    %3 = vector.shape_cast %2 : vector<8xf32> to vector<8x1xf32>
    %cst_2 = arith.constant 3.200000e+01 : f32
    %4 = vector.broadcast %cst_2 : f32 to vector<8x1xf32>
    %5 = arith.divf %3, %4 : vector<8x1xf32>
    %6 = vector.broadcast %5 : vector<8x1xf32> to vector<8x32xf32>
    %7 = arith.subf %1, %6 : vector<8x32xf32>
    %8 = arith.mulf %7, %7 : vector<8x32xf32>
    %cst_3 = arith.constant dense<0.000000e+00> : vector<8xf32>
    %9 = vector.multi_reduction <add>, %8, %cst_3 [1] : vector<8x32xf32> to vector<8xf32>
    %10 = vector.shape_cast %9 : vector<8xf32> to vector<8x1xf32>
    %cst_4 = arith.constant 3.200000e+01 : f32
    %11 = vector.broadcast %cst_4 : f32 to vector<8x1xf32>
    %12 = arith.divf %10, %11 : vector<8x1xf32>
    %13 = vector.broadcast %5 : vector<8x1xf32> to vector<8x32xf32>
    %14 = arith.subf %1, %13 : vector<8x32xf32>
    %cst_5 = arith.constant 9.99999974E-6 : f32
    %15 = vector.broadcast %cst_5 : f32 to vector<8x1xf32>
    %16 = arith.addf %12, %15 : vector<8x1xf32>
    %17 = math.rsqrt %16 : vector<8x1xf32>
    %18 = vector.broadcast %17 : vector<8x1xf32> to vector<8x32xf32>
    %19 = arith.mulf %14, %18 : vector<8x32xf32>
    %c0_6 = arith.constant 0 : index
    %c0_7 = arith.constant 0 : index
    %20 = vector.load %arg2[%c0_6, %c0_7] : memref<1x32xf32, #tpu.memory_space<vmem>>, vector<1x32xf32>
    %21 = vector.broadcast %20 : vector<1x32xf32> to vector<8x32xf32>
    %22 = arith.mulf %19, %21 : vector<8x32xf32>
    %c0_8 = arith.constant 0 : index
    %c0_9 = arith.constant 0 : index
    %23 = vector.load %arg3[%c0_8, %c0_9] : memref<1x32xf32, #tpu.memory_space<vmem>>, vector<1x32xf32>
    %24 = vector.broadcast %23 : vector<1x32xf32> to vector<8x32xf32>
    %25 = arith.addf %22, %24 : vector<8x32xf32>
    %26 = arith.truncf %25 : vector<8x32xf32> to vector<8x32xbf16>
    %c0_10 = arith.constant 0 : index
    %c0_11 = arith.constant 0 : index
    %27 = vector.load %arg6[%c0_10, %c0_11] : memref<32x96xbf16, #tpu.memory_space<vmem>>, vector<32x96xbf16>
    %cst_12 = arith.constant dense<0.000000e+00> : vector<8x96xf32>
    %28 = tpu.matmul %26, %27, %cst_12 {dimension_numbers = #tpu.dot_dimension_numbers<[1], [0], [0], [1], [0, 0, 1, 1], [], []>} : vector<8x32xbf16>, vector<32x96xbf16>, vector<8x96xf32> -> vector<8x96xf32>
    %c0_13 = arith.constant 0 : index
    %c0_14 = arith.constant 0 : index
    %29 = vector.load %arg7[%c0_13, %c0_14] : memref<1x96xf32, #tpu.memory_space<vmem>>, vector<1x96xf32>
    %30 = vector.broadcast %29 : vector<1x96xf32> to vector<8x96xf32>
    %31 = arith.addf %28, %30 : vector<8x96xf32>
    %32 = vector.extract_strided_slice %31 {offsets = [0, 0], sizes = [8, 8], strides = [1, 1]} : vector<8x96xf32> to vector<8x8xf32>
    %33 = vector.extract_strided_slice %31 {offsets = [0, 8], sizes = [8, 8], strides = [1, 1]} : vector<8x96xf32> to vector<8x8xf32>
    %34 = vector.extract_strided_slice %31 {offsets = [0, 16], sizes = [8, 8], strides = [1, 1]} : vector<8x96xf32> to vector<8x8xf32>
    %35 = vector.extract_strided_slice %31 {offsets = [0, 24], sizes = [8, 8], strides = [1, 1]} : vector<8x96xf32> to vector<8x8xf32>
    %36 = vector.shape_cast %32 : vector<8x8xf32> to vector<1x8x8xf32>
    %37 = vector.shape_cast %33 : vector<8x8xf32> to vector<1x8x8xf32>
    %38 = vector.shape_cast %34 : vector<8x8xf32> to vector<1x8x8xf32>
    %39 = vector.shape_cast %35 : vector<8x8xf32> to vector<1x8x8xf32>
    %40 = tpu.concatenate %36, %37, %38, %39 in 0 : vector<1x8x8xf32>, vector<1x8x8xf32>, vector<1x8x8xf32>, vector<1x8x8xf32> -> vector<4x8x8xf32>
    %cst_15 = arith.constant 0.353553385 : f32
    %41 = vector.broadcast %cst_15 : f32 to vector<4x8x8xf32>
    %42 = arith.mulf %40, %41 : vector<4x8x8xf32>
    %43 = arith.truncf %42 : vector<4x8x8xf32> to vector<4x8x8xbf16>
    %44 = vector.extract_strided_slice %31 {offsets = [0, 32], sizes = [8, 8], strides = [1, 1]} : vector<8x96xf32> to vector<8x8xf32>
    %45 = vector.extract_strided_slice %31 {offsets = [0, 40], sizes = [8, 8], strides = [1, 1]} : vector<8x96xf32> to vector<8x8xf32>
    %46 = vector.extract_strided_slice %31 {offsets = [0, 48], sizes = [8, 8], strides = [1, 1]} : vector<8x96xf32> to vector<8x8xf32>
    %47 = vector.extract_strided_slice %31 {offsets = [0, 56], sizes = [8, 8], strides = [1, 1]} : vector<8x96xf32> to vector<8x8xf32>
    %48 = vector.shape_cast %44 : vector<8x8xf32> to vector<1x8x8xf32>
    %49 = vector.shape_cast %45 : vector<8x8xf32> to vector<1x8x8xf32>
    %50 = vector.shape_cast %46 : vector<8x8xf32> to vector<1x8x8xf32>
    %51 = vector.shape_cast %47 : vector<8x8xf32> to vector<1x8x8xf32>
    %52 = tpu.concatenate %48, %49, %50, %51 in 0 : vector<1x8x8xf32>, vector<1x8x8xf32>, vector<1x8x8xf32>, vector<1x8x8xf32> -> vector<4x8x8xf32>
    %53 = arith.truncf %52 : vector<4x8x8xf32> to vector<4x8x8xbf16>
    %54 = vector.extract_strided_slice %31 {offsets = [0, 64], sizes = [8, 8], strides = [1, 1]} : vector<8x96xf32> to vector<8x8xf32>
    %55 = vector.extract_strided_slice %31 {offsets = [0, 72], sizes = [8, 8], strides = [1, 1]} : vector<8x96xf32> to vector<8x8xf32>
    %56 = vector.extract_strided_slice %31 {offsets = [0, 80], sizes = [8, 8], strides = [1, 1]} : vector<8x96xf32> to vector<8x8xf32>
    %57 = vector.extract_strided_slice %31 {offsets = [0, 88], sizes = [8, 8], strides = [1, 1]} : vector<8x96xf32> to vector<8x8xf32>
    %58 = vector.shape_cast %54 : vector<8x8xf32> to vector<1x8x8xf32>
    %59 = vector.shape_cast %55 : vector<8x8xf32> to vector<1x8x8xf32>
    %60 = vector.shape_cast %56 : vector<8x8xf32> to vector<1x8x8xf32>
    %61 = vector.shape_cast %57 : vector<8x8xf32> to vector<1x8x8xf32>
    %62 = tpu.concatenate %58, %59, %60, %61 in 0 : vector<1x8x8xf32>, vector<1x8x8xf32>, vector<1x8x8xf32>, vector<1x8x8xf32> -> vector<4x8x8xf32>
    %63 = arith.truncf %62 : vector<4x8x8xf32> to vector<4x8x8xbf16>
    "tpu.trace_start"() <{level = 10 : i32, message = "nqd,nkd->nqk"}> : () -> ()
    %cst_16 = arith.constant dense<0.000000e+00> : vector<4x8x8xf32>
    %64 = tpu.matmul %43, %53, %cst_16 {dimension_numbers = #tpu.dot_dimension_numbers<[2], [2], [1], [1], [0, 0, 0, 1, 1, 1], [0], [0]>} : vector<4x8x8xbf16>, vector<4x8x8xbf16>, vector<4x8x8xf32> -> vector<4x8x8xf32>
    "tpu.trace_stop"() : () -> ()
    %65 = tpu.iota {dimensions = array<i32: 0>} : vector<8x8xi32>
    %66 = tpu.iota {dimensions = array<i32: 1>} : vector<8x8xi32>
    %67 = arith.cmpi sge, %65, %66 : vector<8x8xi32>
    %68 = vector.shape_cast %67 : vector<8x8xi1> to vector<1x8x8xi1>
    %cst_17 = arith.constant -1.000000e+30 : f32
    %69 = vector.shape_cast %68 : vector<1x8x8xi1> to vector<1x8x8xi1>
    %70 = vector.broadcast %69 : vector<1x8x8xi1> to vector<4x8x8xi1>
    %71 = vector.broadcast %cst_17 : f32 to vector<4x8x8xf32>
    %72 = arith.select %70, %64, %71 : vector<4x8x8xi1>, vector<4x8x8xf32>
    %cst_18 = arith.constant dense<0xFF800000> : vector<4x8xf32>
    %73 = vector.multi_reduction <maximumf>, %72, %cst_18 [2] : vector<4x8x8xf32> to vector<4x8xf32>
    %74 = vector.shape_cast %73 : vector<4x8xf32> to vector<4x8x1xf32>
    %75 = vector.broadcast %74 : vector<4x8x1xf32> to vector<4x8x8xf32>
    %76 = arith.subf %72, %75 : vector<4x8x8xf32>
    %77 = math.exp %76 : vector<4x8x8xf32>
    %cst_19 = arith.constant dense<0.000000e+00> : vector<4x8xf32>
    %78 = vector.multi_reduction <add>, %77, %cst_19 [2] : vector<4x8x8xf32> to vector<4x8xf32>
    %79 = vector.shape_cast %78 : vector<4x8xf32> to vector<4x8x1xf32>
    %80 = tpu.reciprocal %79 {approx = true} : vector<4x8x1xf32> -> vector<4x8x1xf32>
    %81 = vector.broadcast %80 : vector<4x8x1xf32> to vector<4x8x8xf32>
    %82 = arith.mulf %77, %81 : vector<4x8x8xf32>
    %83 = arith.truncf %82 : vector<4x8x8xf32> to vector<4x8x8xbf16>
    "tpu.trace_start"() <{level = 10 : i32, message = "nqk,nkd->nqd"}> : () -> ()
    %cst_20 = arith.constant dense<0.000000e+00> : vector<4x8x8xf32>
    %84 = tpu.matmul %83, %63, %cst_20 {dimension_numbers = #tpu.dot_dimension_numbers<[2], [1], [1], [2], [0, 0, 0, 1, 1, 2], [0], [0]>} : vector<4x8x8xbf16>, vector<4x8x8xbf16>, vector<4x8x8xf32> -> vector<4x8x8xf32>
    "tpu.trace_stop"() : () -> ()
    %85 = arith.truncf %84 : vector<4x8x8xf32> to vector<4x8x8xbf16>
    %c0_21 = arith.constant 0 : index
    %c0_22 = arith.constant 0 : index
    %c0_23 = arith.constant 0 : index
    %86 = vector.load %arg8[%c0_21, %c0_22, %c0_23] : memref<4x8x32xbf16, #tpu.memory_space<vmem>>, vector<4x8x32xbf16>
    "tpu.trace_start"() <{level = 10 : i32, message = "nqd,ndh->nqh"}> : () -> ()
    %cst_24 = arith.constant dense<0.000000e+00> : vector<4x8x32xf32>
    %87 = tpu.matmul %85, %86, %cst_24 {dimension_numbers = #tpu.dot_dimension_numbers<[2], [1], [1], [2], [0, 0, 0, 1, 1, 2], [0], [0]>} : vector<4x8x8xbf16>, vector<4x8x32xbf16>, vector<4x8x32xf32> -> vector<4x8x32xf32>
    "tpu.trace_stop"() : () -> ()
    %88 = vector.extract_strided_slice %87 {offsets = [0, 0, 0], sizes = [1, 8, 32], strides = [1, 1, 1]} : vector<4x8x32xf32> to vector<1x8x32xf32>
    %89 = vector.shape_cast %88 : vector<1x8x32xf32> to vector<8x32xf32>
    %90 = vector.extract_strided_slice %87 {offsets = [1, 0, 0], sizes = [1, 8, 32], strides = [1, 1, 1]} : vector<4x8x32xf32> to vector<1x8x32xf32>
    %91 = vector.shape_cast %90 : vector<1x8x32xf32> to vector<8x32xf32>
    %92 = arith.addf %89, %91 : vector<8x32xf32>
    %93 = vector.extract_strided_slice %87 {offsets = [2, 0, 0], sizes = [1, 8, 32], strides = [1, 1, 1]} : vector<4x8x32xf32> to vector<1x8x32xf32>
    %94 = vector.shape_cast %93 : vector<1x8x32xf32> to vector<8x32xf32>
    %95 = arith.addf %92, %94 : vector<8x32xf32>
    %96 = vector.extract_strided_slice %87 {offsets = [3, 0, 0], sizes = [1, 8, 32], strides = [1, 1, 1]} : vector<4x8x32xf32> to vector<1x8x32xf32>
    %97 = vector.shape_cast %96 : vector<1x8x32xf32> to vector<8x32xf32>
    %98 = arith.addf %95, %97 : vector<8x32xf32>
    %c0_25 = arith.constant 0 : index
    %c0_26 = arith.constant 0 : index
    %99 = vector.load %arg9[%c0_25, %c0_26] : memref<1x32xf32, #tpu.memory_space<vmem>>, vector<1x32xf32>
    %100 = vector.broadcast %99 : vector<1x32xf32> to vector<8x32xf32>
    %101 = arith.addf %98, %100 : vector<8x32xf32>
    %102 = arith.addf %1, %101 : vector<8x32xf32>
    %cst_27 = arith.constant dense<0.000000e+00> : vector<8xf32>
    %103 = vector.multi_reduction <add>, %102, %cst_27 [1] : vector<8x32xf32> to vector<8xf32>
    %104 = vector.shape_cast %103 : vector<8xf32> to vector<8x1xf32>
    %cst_28 = arith.constant 3.200000e+01 : f32
    %105 = vector.broadcast %cst_28 : f32 to vector<8x1xf32>
    %106 = arith.divf %104, %105 : vector<8x1xf32>
    %107 = vector.broadcast %106 : vector<8x1xf32> to vector<8x32xf32>
    %108 = arith.subf %102, %107 : vector<8x32xf32>
    %109 = arith.mulf %108, %108 : vector<8x32xf32>
    %cst_29 = arith.constant dense<0.000000e+00> : vector<8xf32>
    %110 = vector.multi_reduction <add>, %109, %cst_29 [1] : vector<8x32xf32> to vector<8xf32>
    %111 = vector.shape_cast %110 : vector<8xf32> to vector<8x1xf32>
    %cst_30 = arith.constant 3.200000e+01 : f32
    %112 = vector.broadcast %cst_30 : f32 to vector<8x1xf32>
    %113 = arith.divf %111, %112 : vector<8x1xf32>
    %114 = vector.broadcast %106 : vector<8x1xf32> to vector<8x32xf32>
    %115 = arith.subf %102, %114 : vector<8x32xf32>
    %cst_31 = arith.constant 9.99999974E-6 : f32
    %116 = vector.broadcast %cst_31 : f32 to vector<8x1xf32>
    %117 = arith.addf %113, %116 : vector<8x1xf32>
    %118 = math.rsqrt %117 : vector<8x1xf32>
    %119 = vector.broadcast %118 : vector<8x1xf32> to vector<8x32xf32>
    %120 = arith.mulf %115, %119 : vector<8x32xf32>
    %c0_32 = arith.constant 0 : index
    %c0_33 = arith.constant 0 : index
    %121 = vector.load %arg4[%c0_32, %c0_33] : memref<1x32xf32, #tpu.memory_space<vmem>>, vector<1x32xf32>
    %122 = vector.broadcast %121 : vector<1x32xf32> to vector<8x32xf32>
    %123 = arith.mulf %120, %122 : vector<8x32xf32>
    %c0_34 = arith.constant 0 : index
    %c0_35 = arith.constant 0 : index
    %124 = vector.load %arg5[%c0_34, %c0_35] : memref<1x32xf32, #tpu.memory_space<vmem>>, vector<1x32xf32>
    %125 = vector.broadcast %124 : vector<1x32xf32> to vector<8x32xf32>
    %126 = arith.addf %123, %125 : vector<8x32xf32>
    %c0_36 = arith.constant 0 : index
    %c0_37 = arith.constant 0 : index
    %c0_38 = arith.constant 0 : index
    %127 = vector.load %arg10[%c0_36, %c0_37, %c0_38] : memref<1x8x32xf32, #tpu.memory_space<vmem>>, vector<1x8x32xf32>
    %128 = vector.shape_cast %127 : vector<1x8x32xf32> to vector<8x32xf32>
    %129 = vector.shape_cast %126 : vector<8x32xf32> to vector<1x8x32xf32>
    tpu.vector_store %arg10[%c0_36, %c0_37, %c0_38], %129 {strides = array<i32>} : memref<1x8x32xf32, #tpu.memory_space<vmem>>, vector<1x8x32xf32>,
    return
  }
  func.func @transform_0(%arg0: i32) -> (i32, i32, i32) {
    %c0_i32 = arith.constant 0 : i32
    %c0_i32_0 = arith.constant 0 : i32
    %c0_i32_1 = arith.constant 0 : i32
    return %arg0, %c0_i32, %c0_i32_0 : i32, i32, i32
  }
  func.func @transform_1(%arg0: i32) -> (i32, i32) {
    %c0_i32 = arith.constant 0 : i32
    %c0_i32_0 = arith.constant 0 : i32
    %c0_i32_1 = arith.constant 0 : i32
    return %c0_i32, %c0_i32_0 : i32, i32
  }
  func.func @transform_2(%arg0: i32) -> (i32, i32) {
    %c0_i32 = arith.constant 0 : i32
    %c0_i32_0 = arith.constant 0 : i32
    %c0_i32_1 = arith.constant 0 : i32
    return %c0_i32, %c0_i32_0 : i32, i32
  }
  func.func @transform_3(%arg0: i32) -> (i32, i32) {
    %c0_i32 = arith.constant 0 : i32
    %c0_i32_0 = arith.constant 0 : i32
    %c0_i32_1 = arith.constant 0 : i32
    return %c0_i32, %c0_i32_0 : i32, i32
  }
  func.func @transform_4(%arg0: i32) -> (i32, i32) {
    %c0_i32 = arith.constant 0 : i32
    %c0_i32_0 = arith.constant 0 : i32
    %c0_i32_1 = arith.constant 0 : i32
    return %c0_i32, %c0_i32_0 : i32, i32
  }
  func.func @transform_5(%arg0: i32) -> (i32, i32) {
    %c0_i32 = arith.constant 0 : i32
    %c0_i32_0 = arith.constant 0 : i32
    %c0_i32_1 = arith.constant 0 : i32
    return %c0_i32, %c0_i32_0 : i32, i32
  }
  func.func @transform_6(%arg0: i32) -> (i32, i32) {
    %c0_i32 = arith.constant 0 : i32
    %c0_i32_0 = arith.constant 0 : i32
    %c0_i32_1 = arith.constant 0 : i32
    return %c0_i32, %c0_i32_0 : i32, i32
  }
  func.func @transform_7(%arg0: i32) -> (i32, i32, i32) {
    %c0_i32 = arith.constant 0 : i32
    %c0_i32_0 = arith.constant 0 : i32
    %c0_i32_1 = arith.constant 0 : i32
    %c0_i32_2 = arith.constant 0 : i32
    return %c0_i32, %c0_i32_0, %c0_i32_1 : i32, i32, i32
  }
  func.func @transform_8(%arg0: i32) -> (i32, i32) {
    %c0_i32 = arith.constant 0 : i32
    %c0_i32_0 = arith.constant 0 : i32
    %c0_i32_1 = arith.constant 0 : i32
    return %c0_i32, %c0_i32_0 : i32, i32
  }
  func.func @transform_9(%arg0: i32) -> (i32, i32, i32) {
    %c0_i32 = arith.constant 0 : i32
    %c0_i32_0 = arith.constant 0 : i32
    %c0_i32_1 = arith.constant 0 : i32
    return %arg0, %c0_i32, %c0_i32_0 : i32, i32, i32
  }
}

module attributes {stable_mosaic.version = 11 : i64} {
  func.func @moe_expert_kernel(%arg0: i32, %arg1: memref<1x4x32xf32, #tpu.memory_space<vmem>>, %arg2: memref<1x4x1xf32, #tpu.memory_space<vmem>>, %arg3: memref<1x32x64xbf16, #tpu.memory_space<vmem>>, %arg4: memref<1x1x64xf32, #tpu.memory_space<vmem>>, %arg5: memref<1x64x32xbf16, #tpu.memory_space<vmem>>, %arg6: memref<1x1x32xf32, #tpu.memory_space<vmem>>, %arg7: memref<1x4x32xf32, #tpu.memory_space<vmem>>) attributes {dimension_semantics = [#tpu.dimension_semantics<parallel>], iteration_bounds = array<i64: 4>, scalar_prefetch = 0 : i64, scratch_operands = 0 : i64, tpu.core_type = #tpu.core_type<tc>, window_params = [{transform_indices = @transform_0, window_bounds = array<i64: 1, 4, 32>}, {transform_indices = @transform_1, window_bounds = array<i64: 1, 4, 1>}, {transform_indices = @transform_2, window_bounds = array<i64: 1, 32, 64>}, {transform_indices = @transform_3, window_bounds = array<i64: 1, 1, 64>}, {transform_indices = @transform_4, window_bounds = array<i64: 1, 64, 32>}, {transform_indices = @transform_5, window_bounds = array<i64: 1, 1, 32>}, {transform_indices = @transform_6, window_bounds = array<i64: 1, 4, 32>}]} {
    %c0 = arith.constant 0 : index
    %c0_0 = arith.constant 0 : index
    %c0_1 = arith.constant 0 : index
    %0 = vector.load %arg1[%c0, %c0_0, %c0_1] : memref<1x4x32xf32, #tpu.memory_space<vmem>>, vector<1x4x32xf32>
    %1 = vector.shape_cast %0 : vector<1x4x32xf32> to vector<4x32xf32>
    %2 = arith.truncf %1 : vector<4x32xf32> to vector<4x32xbf16>
    %c0_2 = arith.constant 0 : index
    %c0_3 = arith.constant 0 : index
    %c0_4 = arith.constant 0 : index
    %3 = vector.load %arg3[%c0_2, %c0_3, %c0_4] : memref<1x32x64xbf16, #tpu.memory_space<vmem>>, vector<1x32x64xbf16>
    %4 = vector.shape_cast %3 : vector<1x32x64xbf16> to vector<32x64xbf16>
    %cst = arith.constant dense<0.000000e+00> : vector<4x64xf32>
    %5 = tpu.matmul %2, %4, %cst {dimension_numbers = #tpu.dot_dimension_numbers<[1], [0], [0], [1], [0, 0, 1, 1], [], []>} : vector<4x32xbf16>, vector<32x64xbf16>, vector<4x64xf32> -> vector<4x64xf32>
    %c0_5 = arith.constant 0 : index
    %c0_6 = arith.constant 0 : index
    %c0_7 = arith.constant 0 : index
    %6 = vector.load %arg4[%c0_5, %c0_6, %c0_7] : memref<1x1x64xf32, #tpu.memory_space<vmem>>, vector<1x1x64xf32>
    %7 = vector.shape_cast %6 : vector<1x1x64xf32> to vector<1x64xf32>
    %8 = vector.broadcast %7 : vector<1x64xf32> to vector<4x64xf32>
    %9 = arith.addf %5, %8 : vector<4x64xf32>
    %cst_8 = arith.constant 0.000000e+00 : f32
    %10 = vector.broadcast %cst_8 : f32 to vector<4x64xf32>
    %11 = arith.maximumf %9, %10 : vector<4x64xf32>
    %12 = arith.truncf %11 : vector<4x64xf32> to vector<4x64xbf16>
    %c0_9 = arith.constant 0 : index
    %c0_10 = arith.constant 0 : index
    %c0_11 = arith.constant 0 : index
    %13 = vector.load %arg5[%c0_9, %c0_10, %c0_11] : memref<1x64x32xbf16, #tpu.memory_space<vmem>>, vector<1x64x32xbf16>
    %14 = vector.shape_cast %13 : vector<1x64x32xbf16> to vector<64x32xbf16>
    %cst_12 = arith.constant dense<0.000000e+00> : vector<4x32xf32>
    %15 = tpu.matmul %12, %14, %cst_12 {dimension_numbers = #tpu.dot_dimension_numbers<[1], [0], [0], [1], [0, 0, 1, 1], [], []>} : vector<4x64xbf16>, vector<64x32xbf16>, vector<4x32xf32> -> vector<4x32xf32>
    %c0_13 = arith.constant 0 : index
    %c0_14 = arith.constant 0 : index
    %c0_15 = arith.constant 0 : index
    %16 = vector.load %arg6[%c0_13, %c0_14, %c0_15] : memref<1x1x32xf32, #tpu.memory_space<vmem>>, vector<1x1x32xf32>
    %17 = vector.shape_cast %16 : vector<1x1x32xf32> to vector<1x32xf32>
    %18 = vector.broadcast %17 : vector<1x32xf32> to vector<4x32xf32>
    %19 = arith.addf %15, %18 : vector<4x32xf32>
    %c0_16 = arith.constant 0 : index
    %c0_17 = arith.constant 0 : index
    %c0_18 = arith.constant 0 : index
    %20 = vector.load %arg2[%c0_16, %c0_17, %c0_18] : memref<1x4x1xf32, #tpu.memory_space<vmem>>, vector<1x4x1xf32>
    %21 = vector.shape_cast %20 : vector<1x4x1xf32> to vector<4x1xf32>
    %22 = vector.broadcast %21 : vector<4x1xf32> to vector<4x32xf32>
    %23 = arith.mulf %22, %19 : vector<4x32xf32>
    %c0_19 = arith.constant 0 : index
    %c0_20 = arith.constant 0 : index
    %c0_21 = arith.constant 0 : index
    %24 = vector.load %arg7[%c0_19, %c0_20, %c0_21] : memref<1x4x32xf32, #tpu.memory_space<vmem>>, vector<1x4x32xf32>
    %25 = vector.shape_cast %24 : vector<1x4x32xf32> to vector<4x32xf32>
    %26 = vector.shape_cast %23 : vector<4x32xf32> to vector<1x4x32xf32>
    tpu.vector_store %arg7[%c0_19, %c0_20, %c0_21], %26 {strides = array<i32>} : memref<1x4x32xf32, #tpu.memory_space<vmem>>, vector<1x4x32xf32>,
    return
  }
  func.func @transform_0(%arg0: i32) -> (i32, i32, i32) {
    %c0_i32 = arith.constant 0 : i32
    %c0_i32_0 = arith.constant 0 : i32
    %c0_i32_1 = arith.constant 0 : i32
    return %arg0, %c0_i32, %c0_i32_0 : i32, i32, i32
  }
  func.func @transform_1(%arg0: i32) -> (i32, i32, i32) {
    %c0_i32 = arith.constant 0 : i32
    %c0_i32_0 = arith.constant 0 : i32
    %c0_i32_1 = arith.constant 0 : i32
    return %arg0, %c0_i32, %c0_i32_0 : i32, i32, i32
  }
  func.func @transform_2(%arg0: i32) -> (i32, i32, i32) {
    %c0_i32 = arith.constant 0 : i32
    %c0_i32_0 = arith.constant 0 : i32
    %c0_i32_1 = arith.constant 0 : i32
    return %arg0, %c0_i32, %c0_i32_0 : i32, i32, i32
  }
  func.func @transform_3(%arg0: i32) -> (i32, i32, i32) {
    %c0_i32 = arith.constant 0 : i32
    %c0_i32_0 = arith.constant 0 : i32
    %c0_i32_1 = arith.constant 0 : i32
    return %arg0, %c0_i32, %c0_i32_0 : i32, i32, i32
  }
  func.func @transform_4(%arg0: i32) -> (i32, i32, i32) {
    %c0_i32 = arith.constant 0 : i32
    %c0_i32_0 = arith.constant 0 : i32
    %c0_i32_1 = arith.constant 0 : i32
    return %arg0, %c0_i32, %c0_i32_0 : i32, i32, i32
  }
  func.func @transform_5(%arg0: i32) -> (i32, i32, i32) {
    %c0_i32 = arith.constant 0 : i32
    %c0_i32_0 = arith.constant 0 : i32
    %c0_i32_1 = arith.constant 0 : i32
    return %arg0, %c0_i32, %c0_i32_0 : i32, i32, i32
  }
  func.func @transform_6(%arg0: i32) -> (i32, i32, i32) {
    %c0_i32 = arith.constant 0 : i32
    %c0_i32_0 = arith.constant 0 : i32
    %c0_i32_1 = arith.constant 0 : i32
    return %arg0, %c0_i32, %c0_i32_0 : i32, i32, i32
  }
}

</mosaic_0001>

<llo_original>
// kernel: moe_block_forward.3
$region0: #{moe_block_forward.3}
  #allocation0 [shape = 'u32[]', space=smem, size = 0x4, offset = 0x4, fixed_abs, tag = 'smem constant byte address 0x4 - core index']
  #allocation1 [shape = 'u32[144,128]{1,0:T(1,128)}', space=vmem, size = 0x12000, scoped, tag = 'internal scratch']
  %s0 = inlined_call_operand.vmem [shape: f32[4,4,32], index: 0, kind: input, shape index: {}]
  %s1 = inlined_call_operand.vmem [shape: f32[4,4,1], index: 1, kind: input, shape index: {}]
  %s2 = inlined_call_operand.vmem [shape: bf16[4,32,64], index: 2, kind: input, shape index: {}]
  %s3 = inlined_call_operand.vmem [shape: f32[4,1,64], index: 3, kind: input, shape index: {}]
  %s4 = inlined_call_operand.vmem [shape: bf16[4,64,32], index: 4, kind: input, shape index: {}]
  %s5 = inlined_call_operand.vmem [shape: f32[4,1,32], index: 5, kind: input, shape index: {}]
  %s6 = inlined_call_operand.vmem [shape: f32[4,4,32], index: 6, kind: output, shape index: {}]
  %s7 = sld [smem:[#allocation0]]
  $region57: #{moe_block_forward.3} parent=0
    _
  %s9 = ssub.s32 1, %s7
  %s10 = scalar_select 0, %s9, %s7
  loop: start=0, step=1, limit=6
  $region2: #{moe_block_forward.3} parent=0 // loop_pre_header
    _
  $region3: #{moe_block_forward.3} parent=0 // loop_header
    %s12 = sphi 0, %s16
    %p13 = scmp.ge.s32.totalorder %s12, 6
    %s22 = sphi 0, %s24
    %s25 = sphi 0, %s22
    %s26 = sphi 0, %s25
    %s42 = sphi 0, %s26
    %s48 = sphi 0, %s50
    %s51 = sphi 0, %s48
    %s52 = sphi 0, %s51
    %s68 = sphi 0, %s52
    %s74 = sphi 0, %s76
    %s77 = sphi 0, %s74
    %s78 = sphi 0, %s77
    %s94 = sphi 0, %s78
    %s100 = sphi 0, %s102
    %s103 = sphi 0, %s100
    %s104 = sphi 0, %s103
    %s120 = sphi 0, %s104
    %s126 = sphi 0, %s128
    %s129 = sphi 0, %s126
    %s130 = sphi 0, %s129
    %s146 = sphi 0, %s130
    %s152 = sphi 0, %s154
    %s155 = sphi 0, %s152
    %s156 = sphi 0, %s155
    %s172 = sphi 0, %s156
    %s178 = sphi 0, %s180
    %s181 = sphi 0, %s178
    %s182 = sphi 0, %s181
    %s198 = sphi 0, %s182
  $region4: #{moe_block_forward.3} parent=0 // loop_header_branch
    %15 = sbr.rel (%p13) target = $region8
  $region5: #{moe_block_forward.3} parent=0 // loop_body
    %s17 = ssub.s32 %s12, 1
    %s18 = ssub.s32 %s12, 2
    %s19 = sadd.s32 %s12, 1
    %s20 = ssub.s32 %s12, %s19
    %p21 = scmp.eq.s32.totalorder %s20, 0
    %s23 = sadd.s32 %s22, 1
    %s24 = scalar_select %p21, %s22, %s23
    %p27 = pneg %p21
    %p28 = scmp.eq.s32.totalorder %s12, 3
    %p29 = por %p27, %p28
    %p30 = scmp.ne.s32.totalorder %s22, %s25
    %p31 = scmp.eq.s32.totalorder %s12, 0
    %p32 = por %p30, %p31
    %p33 = scmp.ne.s32.totalorder %s22, %s25
    %p34 = scmp.eq.s32.totalorder %s17, 3
    %p35 = por %p33, %p34
    %p36 = scmp.ne.s32.totalorder %s25, %s26
    %p37 = scmp.eq.s32.totalorder %s17, 0
    %p38 = por %p36, %p37
    %p39 = scmp.ne.s32.totalorder %s25, %s26
    %p40 = scmp.eq.s32.totalorder %s18, 3
    %p41 = por %p39, %p40
    %p43 = scmp.ne.s32.totalorder %s26, %s42
    %p44 = scmp.eq.s32.totalorder %s18, 0
    %p45 = por %p43, %p44
    %s46 = ssub.s32 %s12, %s19
    %p47 = scmp.eq.s32.totalorder %s46, 0
    %s49 = sadd.s32 %s48, 1
    %s50 = scalar_select %p47, %s48, %s49
    %p53 = pneg %p47
    %p54 = scmp.eq.s32.totalorder %s12, 3
    %p55 = por %p53, %p54
    %p56 = scmp.ne.s32.totalorder %s48, %s51
    %p57 = scmp.eq.s32.totalorder %s12, 0
    %p58 = por %p56, %p57
    %p59 = scmp.ne.s32.totalorder %s48, %s51
    %p60 = scmp.eq.s32.totalorder %s17, 3
    %p61 = por %p59, %p60
    %p62 = scmp.ne.s32.totalorder %s51, %s52
    %p63 = scmp.eq.s32.totalorder %s17, 0
    %p64 = por %p62, %p63
    %p65 = scmp.ne.s32.totalorder %s51, %s52
    %p66 = scmp.eq.s32.totalorder %s18, 3
    %p67 = por %p65, %p66
    %p69 = scmp.ne.s32.totalorder %s52, %s68
    %p70 = scmp.eq.s32.totalorder %s18, 0
    %p71 = por %p69, %p70
    %s72 = ssub.s32 %s12, %s19
    %p73 = scmp.eq.s32.totalorder %s72, 0
    %s75 = sadd.s32 %s74, 1
    %s76 = scalar_select %p73, %s74, %s75
    %p79 = pneg %p73
    %p80 = scmp.eq.s32.totalorder %s12, 3
    %p81 = por %p79, %p80
    %p82 = scmp.ne.s32.totalorder %s74, %s77
    %p83 = scmp.eq.s32.totalorder %s12, 0
    %p84 = por %p82, %p83
    %p85 = scmp.ne.s32.totalorder %s74, %s77
    %p86 = scmp.eq.s32.totalorder %s17, 3
    %p87 = por %p85, %p86
    %p88 = scmp.ne.s32.totalorder %s77, %s78
    %p89 = scmp.eq.s32.totalorder %s17, 0
    %p90 = por %p88, %p89
    %p91 = scmp.ne.s32.totalorder %s77, %s78
    %p92 = scmp.eq.s32.totalorder %s18, 3
    %p93 = por %p91, %p92
    %p95 = scmp.ne.s32.totalorder %s78, %s94
    %p96 = scmp.eq.s32.totalorder %s18, 0
    %p97 = por %p95, %p96
    %s98 = ssub.s32 %s12, %s19
    %p99 = scmp.eq.s32.totalorder %s98, 0
    %s101 = sadd.s32 %s100, 1
    %s102 = scalar_select %p99, %s100, %s101
    %p105 = pneg %p99
    %p106 = scmp.eq.s32.totalorder %s12, 3
    %p107 = por %p105, %p106
    %p108 = scmp.ne.s32.totalorder %s100, %s103
    %p109 = scmp.eq.s32.totalorder %s12, 0
    %p110 = por %p108, %p109
    %p111 = scmp.ne.s32.totalorder %s100, %s103
    %p112 = scmp.eq.s32.totalorder %s17, 3
    %p113 = por %p111, %p112
    %p114 = scmp.ne.s32.totalorder %s103, %s104
    %p115 = scmp.eq.s32.totalorder %s17, 0
    %p116 = por %p114, %p115
    %p117 = scmp.ne.s32.totalorder %s103, %s104
    %p118 = scmp.eq.s32.totalorder %s18, 3
    %p119 = por %p117, %p118
    %p121 = scmp.ne.s32.totalorder %s104, %s120
    %p122 = scmp.eq.s32.totalorder %s18, 0
    %p123 = por %p121, %p122
    %s124 = ssub.s32 %s12, %s19
    %p125 = scmp.eq.s32.totalorder %s124, 0
    %s127 = sadd.s32 %s126, 1
    %s128 = scalar_select %p125, %s126, %s127
    %p131 = pneg %p125
    %p132 = scmp.eq.s32.totalorder %s12, 3
    %p133 = por %p131, %p132
    %p134 = scmp.ne.s32.totalorder %s126, %s129
    %p135 = scmp.eq.s32.totalorder %s12, 0
    %p136 = por %p134, %p135
    %p137 = scmp.ne.s32.totalorder %s126, %s129
    %p138 = scmp.eq.s32.totalorder %s17, 3
    %p139 = por %p137, %p138
    %p140 = scmp.ne.s32.totalorder %s129, %s130
    %p141 = scmp.eq.s32.totalorder %s17, 0
    %p142 = por %p140, %p141
    %p143 = scmp.ne.s32.totalorder %s129, %s130
    %p144 = scmp.eq.s32.totalorder %s18, 3
    %p145 = por %p143, %p144
    %p147 = scmp.ne.s32.totalorder %s130, %s146
    %p148 = scmp.eq.s32.totalorder %s18, 0
    %p149 = por %p147, %p148
    %s150 = ssub.s32 %s12, %s19
    %p151 = scmp.eq.s32.totalorder %s150, 0
    %s153 = sadd.s32 %s152, 1
    %s154 = scalar_select %p151, %s152, %s153
    %p157 = pneg %p151
    %p158 = scmp.eq.s32.totalorder %s12, 3
    %p159 = por %p157, %p158
    %p160 = scmp.ne.s32.totalorder %s152, %s155
    %p161 = scmp.eq.s32.totalorder %s12, 0
    %p162 = por %p160, %p161
    %p163 = scmp.ne.s32.totalorder %s152, %s155
    %p164 = scmp.eq.s32.totalorder %s17, 3
    %p165 = por %p163, %p164
    %p166 = scmp.ne.s32.totalorder %s155, %s156
    %p167 = scmp.eq.s32.totalorder %s17, 0
    %p168 = por %p166, %p167
    %p169 = scmp.ne.s32.totalorder %s155, %s156
    %p170 = scmp.eq.s32.totalorder %s18, 3
    %p171 = por %p169, %p170
    %p173 = scmp.ne.s32.totalorder %s156, %s172
    %p174 = scmp.eq.s32.totalorder %s18, 0
    %p175 = por %p173, %p174
    %s176 = ssub.s32 %s12, %s19
    %p177 = scmp.eq.s32.totalorder %s176, 0
    %s179 = sadd.s32 %s178, 1
    %s180 = scalar_select %p177, %s178, %s179
    %p183 = pneg %p177
    %p184 = scmp.eq.s32.totalorder %s12, 3
    %p185 = por %p183, %p184
    %p186 = scmp.ne.s32.totalorder %s178, %s181
    %p187 = scmp.eq.s32.totalorder %s12, 0
    %p188 = por %p186, %p187
    %p189 = scmp.ne.s32.totalorder %s178, %s181
    %p190 = scmp.eq.s32.totalorder %s17, 3
    %p191 = por %p189, %p190
    %p192 = scmp.ne.s32.totalorder %s181, %s182
    %p193 = scmp.eq.s32.totalorder %s17, 0
    %p194 = por %p192, %p193
    %p195 = scmp.ne.s32.totalorder %s181, %s182
    %p196 = scmp.eq.s32.totalorder %s18, 3
    %p197 = por %p195, %p196
    %p199 = scmp.ne.s32.totalorder %s182, %s198
    %p200 = scmp.eq.s32.totalorder %s18, 0
    %p201 = por %p199, %p200
    %p202 = scmp.le.s32.totalorder 1, %s12
    %p203 = scmp.lt.s32.totalorder %s12, 5
    %p204 = pnand %p202, %p203
    %p205 = pneg %p204
    // Predicated region
    $region9: #{moe_block_forward.3} parent=5 // pred_check
      _
    $region10: #{moe_block_forward.3} parent=5 // pred_check_branch
      %207 = sbr.rel (%p204) target = $region12
    $region11: #{moe_block_forward.3} parent=5 // pred_region
      %s208 = ssub.s32 %s12, 1
    $region12: #{moe_block_forward.3} parent=5 // pred_fallthru
      _
    %p209 = scmp.lt.s32.totalorder %s12, 4
    // Predicated region
    $region13: #{moe_block_forward.3} parent=5 // pred_check
      %p210 = pneg %p209
    $region14: #{moe_block_forward.3} parent=5 // pred_check_branch
      %212 = sbr.rel (%p210) target = $region16
    $region15: #{moe_block_forward.3} parent=5 // pred_region
      // Predicated region
      $region17: #{moe_block_forward.3} parent=15 // pred_check
        %p213 = pneg %p32
      $region18: #{moe_block_forward.3} parent=15 // pred_check_branch
        %215 = sbr.rel (%p213) target = $region20
      $region19: #{moe_block_forward.3} parent=15 // pred_region
        %p216 = scmp.lt.s32.totalorder %s12, 3
        %s217 = scalar_select %p216, %s12, 3
        %s218 = smul.addr %s217, 4
        %s219 = scalar_lea.vmem %s0, %s218
      $region20: #{moe_block_forward.3} parent=15 // pred_fallthru
        _
      // Predicated region
      $region21: #{moe_block_forward.3} parent=15 // pred_check
        %p220 = pneg %p58
      $region22: #{moe_block_forward.3} parent=15 // pred_check_branch
        %222 = sbr.rel (%p220) target = $region24
      $region23: #{moe_block_forward.3} parent=15 // pred_region
        %p223 = scmp.lt.s32.totalorder %s12, 3
        %s224 = scalar_select %p223, %s12, 3
        %s225 = smul.addr %s224, 4
        %s226 = scalar_lea.vmem %s1, %s225
      $region24: #{moe_block_forward.3} parent=15 // pred_fallthru
        _
      // Predicated region
      $region25: #{moe_block_forward.3} parent=15 // pred_check
        %p227 = pneg %p84
      $region26: #{moe_block_forward.3} parent=15 // pred_check_branch
        %229 = sbr.rel (%p227) target = $region28
      $region27: #{moe_block_forward.3} parent=15 // pred_region
        %p230 = scmp.lt.s32.totalorder %s12, 3
        %s231 = scalar_select %p230, %s12, 3
        %s232 = smul.addr %s231, 4
        %s233 = smul.addr %s232, 4
        %s234 = scalar_lea.vmem %s2, %s233
      $region28: #{moe_block_forward.3} parent=15 // pred_fallthru
        _
      // Predicated region
      $region29: #{moe_block_forward.3} parent=15 // pred_check
        %p235 = pneg %p110
      $region30: #{moe_block_forward.3} parent=15 // pred_check_branch
        %237 = sbr.rel (%p235) target = $region32
      $region31: #{moe_block_forward.3} parent=15 // pred_region
        %p238 = scmp.lt.s32.totalorder %s12, 3
        %s239 = scalar_select %p238, %s12, 3
        %s240 = scalar_lea.vmem %s3, %s239
      $region32: #{moe_block_forward.3} parent=15 // pred_fallthru
        _
      // Predicated region
      $region33: #{moe_block_forward.3} parent=15 // pred_check
        %p241 = pneg %p136
      $region34: #{moe_block_forward.3} parent=15 // pred_check_branch
        %243 = sbr.rel (%p241) target = $region36
      $region35: #{moe_block_forward.3} parent=15 // pred_region
        %p244 = scmp.lt.s32.totalorder %s12, 3
        %s245 = scalar_select %p244, %s12, 3
        %s246 = smul.addr %s245, 8
        %s247 = smul.addr %s246, 4
        %s248 = scalar_lea.vmem %s4, %s247
      $region36: #{moe_block_forward.3} parent=15 // pred_fallthru
        _
      // Predicated region
      $region37: #{moe_block_forward.3} parent=15 // pred_check
        %p249 = pneg %p162
      $region38: #{moe_block_forward.3} parent=15 // pred_check_branch
        %251 = sbr.rel (%p249) target = $region40
      $region39: #{moe_block_forward.3} parent=15 // pred_region
        %p252 = scmp.lt.s32.totalorder %s12, 3
        %s253 = scalar_select %p252, %s12, 3
        %s254 = scalar_lea.vmem %s5, %s253
      $region40: #{moe_block_forward.3} parent=15 // pred_fallthru
        _
    $region16: #{moe_block_forward.3} parent=5 // pred_fallthru
      _
    %p255 = scmp.le.s32.totalorder 1, %s12
    %p256 = scmp.lt.s32.totalorder %s12, 5
    %p257 = pnand %p255, %p256
    %p258 = pneg %p257
    // Predicated region
    $region41: #{moe_block_forward.3} parent=5 // pred_check
      _
    $region42: #{moe_block_forward.3} parent=5 // pred_check_branch
      %260 = sbr.rel (%p257) target = $region44
    $region43: #{moe_block_forward.3} parent=5 // pred_region
      %s261 = ssub.s32 %s12, 1
      %p262 = scmp.lt.s32.totalorder %s17, 3
      %s263 = scalar_select %p262, %s17, 3
      %s264 = smul.addr %s263, 4
      %s265 = scalar_lea.vmem %s0, %s264
      %p266 = pneg %p38
      %p267 = pneg %p35
      %p268 = scmp.lt.s32.totalorder %s17, 3
      %s269 = scalar_select %p268, %s17, 3
      %s270 = smul.addr %s269, 4
      %s271 = scalar_lea.vmem %s1, %s270
      %p272 = pneg %p64
      %p273 = pneg %p61
      %p274 = scmp.lt.s32.totalorder %s17, 3
      %s275 = scalar_select %p274, %s17, 3
      %s276 = smul.addr %s275, 4
      %s277 = smul.addr %s276, 4
      %s278 = scalar_lea.vmem %s2, %s277
      %p279 = pneg %p90
      %p280 = pneg %p87
      %p281 = scmp.lt.s32.totalorder %s17, 3
      %s282 = scalar_select %p281, %s17, 3
      %s283 = scalar_lea.vmem %s3, %s282
      %p284 = pneg %p116
      %p285 = pneg %p113
      %p286 = scmp.lt.s32.totalorder %s17, 3
      %s287 = scalar_select %p286, %s17, 3
      %s288 = smul.addr %s287, 8
      %s289 = smul.addr %s288, 4
      %s290 = scalar_lea.vmem %s4, %s289
      %p291 = pneg %p142
      %p292 = pneg %p139
      %p293 = scmp.lt.s32.totalorder %s17, 3
      %s294 = scalar_select %p293, %s17, 3
      %s295 = scalar_lea.vmem %s5, %s294
      %p296 = pneg %p168
      %p297 = pneg %p165
      %p298 = pneg %p194
      %p299 = pneg %p191
      %p300 = scmp.lt.s32.totalorder %s17, 3
      %s301 = scalar_select %p300, %s17, 3
      %s302 = smul.addr %s301, 4
      %s303 = scalar_lea.vmem %s6, %s302
      %p304 = scmp.lt.s32.totalorder %s17, 3
      %s305 = scalar_select %p304, %s17, 3
      %s306 = smul.addr %s305, 4
      %s307 = scalar_lea.vmem %s0, %s306
      %p308 = scmp.lt.s32.totalorder %s17, 3
      %s309 = scalar_select %p308, %s17, 3
      %s310 = smul.addr %s309, 4
      %s311 = scalar_lea.vmem %s1, %s310
      %p312 = scmp.lt.s32.totalorder %s17, 3
      %s313 = scalar_select %p312, %s17, 3
      %s314 = smul.addr %s313, 4
      %s315 = smul.addr %s314, 4
      %s316 = scalar_lea.vmem %s2, %s315
      %p317 = scmp.lt.s32.totalorder %s17, 3
      %s318 = scalar_select %p317, %s17, 3
      %s319 = scalar_lea.vmem %s3, %s318
      %p320 = scmp.lt.s32.totalorder %s17, 3
      %s321 = scalar_select %p320, %s17, 3
      %s322 = smul.addr %s321, 8
      %s323 = smul.addr %s322, 4
      %s324 = scalar_lea.vmem %s4, %s323
      %p325 = scmp.lt.s32.totalorder %s17, 3
      %s326 = scalar_select %p325, %s17, 3
      %s327 = scalar_lea.vmem %s5, %s326
      %p328 = scmp.lt.s32.totalorder %s17, 3
      %s329 = scalar_select %p328, %s17, 3
      %s330 = smul.addr %s329, 4
      %s331 = scalar_lea.vmem %s6, %s330
      %v333 = vld [vmem:[%s307] sm:$0xf]
      %v334 = vpack.c.bf16 %v333, %v333
      %v335 = vld [vmem:[%s316] sm:$0xf]
      %v336 = vld [vmem:[%s316 + $0x4] sm:$0xf]
      %v337 = vld [vmem:[%s316 + $0x8] sm:$0xf]
      %v338 = vld [vmem:[%s316 + $0xc] sm:$0xf]
      %v339 = vld [vmem:[%s319] sm:$0x1]
      %v341 = vlaneseq
      %v342 = vshrl.u32 %v341, 7
      %v343 = vsub.s32 0, %v342
      %v344 = vrot.slane %v339, %v343
      %v350 = vunpack.c.l.b16 %v335
      %v351 = vunpack.c.l.b16 %v336
      %v352 = vunpack.c.l.b16 %v337
      %v353 = vunpack.c.l.b16 %v338
      %v354 = vpack.c.b16 %v351, %v350
      %v355 = vpack.c.b16 %v353, %v352
      %vm358 = vcmask 261120
      %v360 = vsel %vm358, %v334, 0
      %362 = vmatprep.subr.bf16.mxu0 0
      %363 = vmatpush1.bf16.msra.mxu0 %v354
      %364 = vmatprep.subr.bf16.mxu0 0
      %365 = vmatpush1.bf16.msra.mxu0 %v355
      %366 = vmatprep.subr.bf16.mxu0 0
      %367 = vmatpush1.bf16.msra.mxu0 0
      %368 = vmatprep.subr.bf16.mxu0 0
      %369 = vmatpush1.bf16.msra.mxu0 0
      %370 = vmatprep.subr.bf16.mxu0 0
      %371 = vmatpush1.bf16.msra.mxu0 0
      %372 = vmatprep.subr.bf16.mxu0 0
      %373 = vmatpush1.bf16.msra.mxu0 0
      %374 = vmatprep.subr.bf16.mxu0 0
      %375 = vmatpush1.bf16.msra.mxu0 0
      %376 = vmatprep.subr.bf16.mxu0 0
      %377 = vmatpush1.bf16.msra.mxu0 0
      %378 = vmatprep.subr.bf16.mxu0 0
      %379 = vmatpush1.bf16.msra.mxu0 0
      %380 = vmatprep.subr.bf16.mxu0 0
      %381 = vmatpush1.bf16.msra.mxu0 0
      %382 = vmatprep.subr.bf16.mxu0 0
      %383 = vmatpush1.bf16.msra.mxu0 0
      %384 = vmatprep.subr.bf16.mxu0 0
      %385 = vmatpush1.bf16.msra.mxu0 0
      %386 = vmatprep.subr.bf16.mxu0 0
      %387 = vmatpush1.bf16.msra.mxu0 0
      %388 = vmatprep.subr.bf16.mxu0 0
      %389 = vmatpush1.bf16.msra.mxu0 0
      %390 = vmatprep.subr.bf16.mxu0 0
      %391 = vmatpush1.bf16.msra.mxu0 0
      %392 = vmatprep.subr.bf16.mxu0 0
      %393 = vmatpush1.bf16.msra.mxu0 0
      %394 = vmatprep.mubr.bf16.mxu0 0
      %395 = vmatmul.mubr.bf16.gmra.mrb[0].mxu0 %v360
      %v396 = vpop.f32.mrb[0].mxu0
      %v397 = vadd.f32 %v344, %v396
      %v398 = vpop.f32.mrb[0].mxu0
      %v399 = vpop.f32.mrb[0].mxu0
      %v400 = vpop.f32.mrb[0].mxu0
      %401 = vdwg.mxu0
      %v402 = vmax.f32 %v397, 0.0
      %v403 = vpack.c.bf16 %v402, %v402
      %v404 = vld [vmem:[%s324] sm:$0xf]
      %v405 = vld [vmem:[%s324 + $0x4] sm:$0xf]
      %v406 = vld [vmem:[%s324 + $0x8] sm:$0xf]
      %v407 = vld [vmem:[%s324 + $0xc] sm:$0xf]
      %v408 = vld [vmem:[%s324 + $0x10] sm:$0xf]
      %v409 = vld [vmem:[%s324 + $0x14] sm:$0xf]
      %v410 = vld [vmem:[%s324 + $0x18] sm:$0xf]
      %v411 = vld [vmem:[%s324 + $0x1c] sm:$0xf]
      %v412 = vld [vmem:[%s327] sm:$0x1]
      %v414 = vlaneseq
      %v415 = vshrl.u32 %v414, 7
      %v416 = vsub.s32 0, %v415
      %v417 = vrot.slane %v412, %v416
      %v427 = vunpack.c.l.b16 %v404
      %v428 = vunpack.c.l.b16 %v405
      %v429 = vunpack.c.l.b16 %v406
      %v430 = vunpack.c.l.b16 %v407
      %v431 = vunpack.c.l.b16 %v408
      %v432 = vunpack.c.l.b16 %v409
      %v433 = vunpack.c.l.b16 %v410
      %v434 = vunpack.c.l.b16 %v411
      %v435 = vpack.c.b16 %v428, %v427
      %v436 = vpack.c.b16 %v430, %v429
      %v437 = vpack.c.b16 %v432, %v431
      %v438 = vpack.c.b16 %v434, %v433
      %vm443 = vcmask 523264
      %v445 = vsel %vm443, %v403, 0
      %447 = vmatprep.subr.bf16.mxu0 0
      %448 = vmatpush1.bf16.msra.mxu0 %v435
      %449 = vmatprep.subr.bf16.mxu0 0
      %450 = vmatpush1.bf16.msra.mxu0 %v436
      %451 = vmatprep.subr.bf16.mxu0 0
      %452 = vmatpush1.bf16.msra.mxu0 %v437
      %453 = vmatprep.subr.bf16.mxu0 0
      %454 = vmatpush1.bf16.msra.mxu0 %v438
      %455 = vmatprep.subr.bf16.mxu0 0
      %456 = vmatpush1.bf16.msra.mxu0 0
      %457 = vmatprep.subr.bf16.mxu0 0
      %458 = vmatpush1.bf16.msra.mxu0 0
      %459 = vmatprep.subr.bf16.mxu0 0
      %460 = vmatpush1.bf16.msra.mxu0 0
      %461 = vmatprep.subr.bf16.mxu0 0
      %462 = vmatpush1.bf16.msra.mxu0 0
      %463 = vmatprep.subr.bf16.mxu0 0
      %464 = vmatpush1.bf16.msra.mxu0 0
      %465 = vmatprep.subr.bf16.mxu0 0
      %466 = vmatpush1.bf16.msra.mxu0 0
      %467 = vmatprep.subr.bf16.mxu0 0
      %468 = vmatpush1.bf16.msra.mxu0 0
      %469 = vmatprep.subr.bf16.mxu0 0
      %470 = vmatpush1.bf16.msra.mxu0 0
      %471 = vmatprep.subr.bf16.mxu0 0
      %472 = vmatpush1.bf16.msra.mxu0 0
      %473 = vmatprep.subr.bf16.mxu0 0
      %474 = vmatpush1.bf16.msra.mxu0 0
      %475 = vmatprep.subr.bf16.mxu0 0
      %476 = vmatpush1.bf16.msra.mxu0 0
      %477 = vmatprep.subr.bf16.mxu0 0
      %478 = vmatpush1.bf16.msra.mxu0 0
      %479 = vmatprep.mubr.bf16.mxu0 0
      %480 = vmatmul.mubr.bf16.gmra.mrb[0].mxu0 %v445
      %v481 = vpop.f32.mrb[0].mxu0
      %v482 = vadd.f32 %v417, %v481
      %v483 = vpop.f32.mrb[0].mxu0
      %v484 = vpop.f32.mrb[0].mxu0
      %v485 = vpop.f32.mrb[0].mxu0
      %486 = vdwg.mxu0
      %v487 = vld [vmem:[%s311] sm:$0xf]
      %489 = vset.pattern.permute.xlu0 0
      %490 = vperm.xlu0 %489, %v487
      %v491 = vpop.permute.xlu0 %490
      %v493 = vmul.f32 %v491, %v482
      %vm494 = vcmask 257024
      %495 = vst.msk [vmem:[%s331] sm:$0xf] %vm494, %v493
      %p496 = scmp.lt.s32.totalorder %s17, 3
      %s497 = scalar_select %p496, %s17, 3
      %s498 = smul.addr %s497, 4
      %s499 = scalar_lea.vmem %s6, %s498
      // Predicated region
      $region45: #{moe_block_forward.3} parent=43 // pred_check
        %p500 = pneg %p191
      $region46: #{moe_block_forward.3} parent=43 // pred_check_branch
        %502 = sbr.rel (%p500) target = $region48
      $region47: #{moe_block_forward.3} parent=43 // pred_region
        _
      $region48: #{moe_block_forward.3} parent=43 // pred_fallthru
        _
    $region44: #{moe_block_forward.3} parent=5 // pred_fallthru
      _
    %p503 = scmp.le.s32.totalorder 2, %s12
    // Predicated region
    $region49: #{moe_block_forward.3} parent=5 // pred_check
      %p504 = pneg %p503
    $region50: #{moe_block_forward.3} parent=5 // pred_check_branch
      %506 = sbr.rel (%p504) target = $region52
    $region51: #{moe_block_forward.3} parent=5 // pred_region
      %s507 = ssub.s32 %s12, 2
      // Predicated region
      $region53: #{moe_block_forward.3} parent=51 // pred_check
        %p508 = pneg %p197
      $region54: #{moe_block_forward.3} parent=51 // pred_check_branch
        %510 = sbr.rel (%p508) target = $region56
      $region55: #{moe_block_forward.3} parent=51 // pred_region
        %p511 = scmp.lt.s32.totalorder %s18, 3
        %s512 = scalar_select %p511, %s18, 3
        %s513 = smul.addr %s512, 4
        %s514 = scalar_lea.vmem %s6, %s513
      $region56: #{moe_block_forward.3} parent=51 // pred_fallthru
        _
    $region52: #{moe_block_forward.3} parent=5 // pred_fallthru
      _
  $region6: #{moe_block_forward.3} parent=0 // loop_footer
    %s16 = sadd.s32 1, %s12
  $region7: #{moe_block_forward.3} parent=0 // loop_footer_branch
    %11 = sbr.rel target = $region3
  $region8: #{moe_block_forward.3} parent=0 // loop_exit
    _

// kernel: moe_block_forward.2
$region0: #{moe_block_forward.2}
  #allocation0 [shape = 'u32[]', space=smem, size = 0x4, offset = 0x4, fixed_abs, tag = 'smem constant byte address 0x4 - core index']
  #allocation1 [shape = 'u32[144,128]{1,0:T(1,128)}', space=vmem, size = 0x12000, scoped, tag = 'internal scratch']
  %s0 = inlined_call_operand.vmem [shape: f32[2,8,32], index: 0, kind: input, shape index: {}]
  %s1 = inlined_call_operand.vmem [shape: f32[1,32], index: 1, kind: input, shape index: {}]
  %s2 = inlined_call_operand.vmem [shape: f32[1,32], index: 2, kind: input, shape index: {}]
  %s3 = inlined_call_operand.vmem [shape: f32[1,32], index: 3, kind: input, shape index: {}]
  %s4 = inlined_call_operand.vmem [shape: f32[1,32], index: 4, kind: input, shape index: {}]
  %s5 = inlined_call_operand.vmem [shape: bf16[32,96], index: 5, kind: input, shape index: {}]
  %s6 = inlined_call_operand.vmem [shape: f32[1,96], index: 6, kind: input, shape index: {}]
  %s7 = inlined_call_operand.vmem [shape: bf16[4,8,32], index: 7, kind: input, shape index: {}]
  %s8 = inlined_call_operand.vmem [shape: f32[1,32], index: 8, kind: input, shape index: {}]
  %s9 = inlined_call_operand.vmem [shape: f32[2,8,32], index: 9, kind: output, shape index: {}]
  %s10 = sld [smem:[#allocation0]]
  $region69: #{moe_block_forward.2} parent=0
    _
  %s12 = ssub.s32 1, %s10
  %s13 = scalar_select 0, %s12, %s10
  loop: start=0, step=1, limit=4
  $region2: #{moe_block_forward.2} parent=0 // loop_pre_header
    _
  $region3: #{moe_block_forward.2} parent=0 // loop_header
    %s15 = sphi 0, %s19
    %p16 = scmp.ge.s32.totalorder %s15, 4
    %s25 = sphi 0, %s27
    %s28 = sphi 0, %s25
    %s29 = sphi 0, %s28
    %s45 = sphi 0, %s29
    %s49 = sphi 0, %s49
    %s51 = sphi 0, %s49
    %s52 = sphi 0, %s51
    %s66 = sphi 0, %s52
    %s70 = sphi 0, %s70
    %s72 = sphi 0, %s70
    %s73 = sphi 0, %s72
    %s87 = sphi 0, %s73
    %s91 = sphi 0, %s91
    %s93 = sphi 0, %s91
    %s94 = sphi 0, %s93
    %s108 = sphi 0, %s94
    %s112 = sphi 0, %s112
    %s114 = sphi 0, %s112
    %s115 = sphi 0, %s114
    %s129 = sphi 0, %s115
    %s133 = sphi 0, %s133
    %s135 = sphi 0, %s133
    %s136 = sphi 0, %s135
    %s150 = sphi 0, %s136
    %s154 = sphi 0, %s154
    %s156 = sphi 0, %s154
    %s157 = sphi 0, %s156
    %s171 = sphi 0, %s157
    %s175 = sphi 0, %s175
    %s177 = sphi 0, %s175
    %s178 = sphi 0, %s177
    %s192 = sphi 0, %s178
    %s196 = sphi 0, %s196
    %s198 = sphi 0, %s196
    %s199 = sphi 0, %s198
    %s213 = sphi 0, %s199
    %s219 = sphi 0, %s221
    %s222 = sphi 0, %s219
    %s223 = sphi 0, %s222
    %s239 = sphi 0, %s223
  $region4: #{moe_block_forward.2} parent=0 // loop_header_branch
    %18 = sbr.rel (%p16) target = $region8
  $region5: #{moe_block_forward.2} parent=0 // loop_body
    %s20 = ssub.s32 %s15, 1
    %s21 = ssub.s32 %s15, 2
    %s22 = sadd.s32 %s15, 1
    %s23 = ssub.s32 %s15, %s22
    %p24 = scmp.eq.s32.totalorder %s23, 0
    %s26 = sadd.s32 %s25, 1
    %s27 = scalar_select %p24, %s25, %s26
    %p30 = pneg %p24
    %p31 = scmp.eq.s32.totalorder %s15, 1
    %p32 = por %p30, %p31
    %p33 = scmp.ne.s32.totalorder %s25, %s28
    %p34 = scmp.eq.s32.totalorder %s15, 0
    %p35 = por %p33, %p34
    %p36 = scmp.ne.s32.totalorder %s25, %s28
    %p37 = scmp.eq.s32.totalorder %s20, 1
    %p38 = por %p36, %p37
    %p39 = scmp.ne.s32.totalorder %s28, %s29
    %p40 = scmp.eq.s32.totalorder %s20, 0
    %p41 = por %p39, %p40
    %p42 = scmp.ne.s32.totalorder %s28, %s29
    %p43 = scmp.eq.s32.totalorder %s21, 1
    %p44 = por %p42, %p43
    %p46 = scmp.ne.s32.totalorder %s29, %s45
    %p47 = scmp.eq.s32.totalorder %s21, 0
    %p48 = por %p46, %p47
    %s50 = sadd.s32 %s49, 1
    %p53 = scmp.eq.s32.totalorder %s15, 1
    %p54 = scmp.ne.s32.totalorder %s49, %s51
    %p55 = scmp.eq.s32.totalorder %s15, 0
    %p56 = por %p54, %p55
    %p57 = scmp.ne.s32.totalorder %s49, %s51
    %p58 = scmp.eq.s32.totalorder %s20, 1
    %p59 = por %p57, %p58
    %p60 = scmp.ne.s32.totalorder %s51, %s52
    %p61 = scmp.eq.s32.totalorder %s20, 0
    %p62 = por %p60, %p61
    %p63 = scmp.ne.s32.totalorder %s51, %s52
    %p64 = scmp.eq.s32.totalorder %s21, 1
    %p65 = por %p63, %p64
    %p67 = scmp.ne.s32.totalorder %s52, %s66
    %p68 = scmp.eq.s32.totalorder %s21, 0
    %p69 = por %p67, %p68
    %s71 = sadd.s32 %s70, 1
    %p74 = scmp.eq.s32.totalorder %s15, 1
    %p75 = scmp.ne.s32.totalorder %s70, %s72
    %p76 = scmp.eq.s32.totalorder %s15, 0
    %p77 = por %p75, %p76
    %p78 = scmp.ne.s32.totalorder %s70, %s72
    %p79 = scmp.eq.s32.totalorder %s20, 1
    %p80 = por %p78, %p79
    %p81 = scmp.ne.s32.totalorder %s72, %s73
    %p82 = scmp.eq.s32.totalorder %s20, 0
    %p83 = por %p81, %p82
    %p84 = scmp.ne.s32.totalorder %s72, %s73
    %p85 = scmp.eq.s32.totalorder %s21, 1
    %p86 = por %p84, %p85
    %p88 = scmp.ne.s32.totalorder %s73, %s87
    %p89 = scmp.eq.s32.totalorder %s21, 0
    %p90 = por %p88, %p89
    %s92 = sadd.s32 %s91, 1
    %p95 = scmp.eq.s32.totalorder %s15, 1
    %p96 = scmp.ne.s32.totalorder %s91, %s93
    %p97 = scmp.eq.s32.totalorder %s15, 0
    %p98 = por %p96, %p97
    %p99 = scmp.ne.s32.totalorder %s91, %s93
    %p100 = scmp.eq.s32.totalorder %s20, 1
    %p101 = por %p99, %p100
    %p102 = scmp.ne.s32.totalorder %s93, %s94
    %p103 = scmp.eq.s32.totalorder %s20, 0
    %p104 = por %p102, %p103
    %p105 = scmp.ne.s32.totalorder %s93, %s94
    %p106 = scmp.eq.s32.totalorder %s21, 1
    %p107 = por %p105, %p106
    %p109 = scmp.ne.s32.totalorder %s94, %s108
    %p110 = scmp.eq.s32.totalorder %s21, 0
    %p111 = por %p109, %p110
    %s113 = sadd.s32 %s112, 1
    %p116 = scmp.eq.s32.totalorder %s15, 1
    %p117 = scmp.ne.s32.totalorder %s112, %s114
    %p118 = scmp.eq.s32.totalorder %s15, 0
    %p119 = por %p117, %p118
    %p120 = scmp.ne.s32.totalorder %s112, %s114
    %p121 = scmp.eq.s32.totalorder %s20, 1
    %p122 = por %p120, %p121
    %p123 = scmp.ne.s32.totalorder %s114, %s115
    %p124 = scmp.eq.s32.totalorder %s20, 0
    %p125 = por %p123, %p124
    %p126 = scmp.ne.s32.totalorder %s114, %s115
    %p127 = scmp.eq.s32.totalorder %s21, 1
    %p128 = por %p126, %p127
    %p130 = scmp.ne.s32.totalorder %s115, %s129
    %p131 = scmp.eq.s32.totalorder %s21, 0
    %p132 = por %p130, %p131
    %s134 = sadd.s32 %s133, 1
    %p137 = scmp.eq.s32.totalorder %s15, 1
    %p138 = scmp.ne.s32.totalorder %s133, %s135
    %p139 = scmp.eq.s32.totalorder %s15, 0
    %p140 = por %p138, %p139
    %p141 = scmp.ne.s32.totalorder %s133, %s135
    %p142 = scmp.eq.s32.totalorder %s20, 1
    %p143 = por %p141, %p142
    %p144 = scmp.ne.s32.totalorder %s135, %s136
    %p145 = scmp.eq.s32.totalorder %s20, 0
    %p146 = por %p144, %p145
    %p147 = scmp.ne.s32.totalorder %s135, %s136
    %p148 = scmp.eq.s32.totalorder %s21, 1
    %p149 = por %p147, %p148
    %p151 = scmp.ne.s32.totalorder %s136, %s150
    %p152 = scmp.eq.s32.totalorder %s21, 0
    %p153 = por %p151, %p152
    %s155 = sadd.s32 %s154, 1
    %p158 = scmp.eq.s32.totalorder %s15, 1
    %p159 = scmp.ne.s32.totalorder %s154, %s156
    %p160 = scmp.eq.s32.totalorder %s15, 0
    %p161 = por %p159, %p160
    %p162 = scmp.ne.s32.totalorder %s154, %s156
    %p163 = scmp.eq.s32.totalorder %s20, 1
    %p164 = por %p162, %p163
    %p165 = scmp.ne.s32.totalorder %s156, %s157
    %p166 = scmp.eq.s32.totalorder %s20, 0
    %p167 = por %p165, %p166
    %p168 = scmp.ne.s32.totalorder %s156, %s157
    %p169 = scmp.eq.s32.totalorder %s21, 1
    %p170 = por %p168, %p169
    %p172 = scmp.ne.s32.totalorder %s157, %s171
    %p173 = scmp.eq.s32.totalorder %s21, 0
    %p174 = por %p172, %p173
    %s176 = sadd.s32 %s175, 1
    %p179 = scmp.eq.s32.totalorder %s15, 1
    %p180 = scmp.ne.s32.totalorder %s175, %s177
    %p181 = scmp.eq.s32.totalorder %s15, 0
    %p182 = por %p180, %p181
    %p183 = scmp.ne.s32.totalorder %s175, %s177
    %p184 = scmp.eq.s32.totalorder %s20, 1
    %p185 = por %p183, %p184
    %p186 = scmp.ne.s32.totalorder %s177, %s178
    %p187 = scmp.eq.s32.totalorder %s20, 0
    %p188 = por %p186, %p187
    %p189 = scmp.ne.s32.totalorder %s177, %s178
    %p190 = scmp.eq.s32.totalorder %s21, 1
    %p191 = por %p189, %p190
    %p193 = scmp.ne.s32.totalorder %s178, %s192
    %p194 = scmp.eq.s32.totalorder %s21, 0
    %p195 = por %p193, %p194
    %s197 = sadd.s32 %s196, 1
    %p200 = scmp.eq.s32.totalorder %s15, 1
    %p201 = scmp.ne.s32.totalorder %s196, %s198
    %p202 = scmp.eq.s32.totalorder %s15, 0
    %p203 = por %p201, %p202
    %p204 = scmp.ne.s32.totalorder %s196, %s198
    %p205 = scmp.eq.s32.totalorder %s20, 1
    %p206 = por %p204, %p205
    %p207 = scmp.ne.s32.totalorder %s198, %s199
    %p208 = scmp.eq.s32.totalorder %s20, 0
    %p209 = por %p207, %p208
    %p210 = scmp.ne.s32.totalorder %s198, %s199
    %p211 = scmp.eq.s32.totalorder %s21, 1
    %p212 = por %p210, %p211
    %p214 = scmp.ne.s32.totalorder %s199, %s213
    %p215 = scmp.eq.s32.totalorder %s21, 0
    %p216 = por %p214, %p215
    %s217 = ssub.s32 %s15, %s22
    %p218 = scmp.eq.s32.totalorder %s217, 0
    %s220 = sadd.s32 %s219, 1
    %s221 = scalar_select %p218, %s219, %s220
    %p224 = pneg %p218
    %p225 = scmp.eq.s32.totalorder %s15, 1
    %p226 = por %p224, %p225
    %p227 = scmp.ne.s32.totalorder %s219, %s222
    %p228 = scmp.eq.s32.totalorder %s15, 0
    %p229 = por %p227, %p228
    %p230 = scmp.ne.s32.totalorder %s219, %s222
    %p231 = scmp.eq.s32.totalorder %s20, 1
    %p232 = por %p230, %p231
    %p233 = scmp.ne.s32.totalorder %s222, %s223
    %p234 = scmp.eq.s32.totalorder %s20, 0
    %p235 = por %p233, %p234
    %p236 = scmp.ne.s32.totalorder %s222, %s223
    %p237 = scmp.eq.s32.totalorder %s21, 1
    %p238 = por %p236, %p237
    %p240 = scmp.ne.s32.totalorder %s223, %s239
    %p241 = scmp.eq.s32.totalorder %s21, 0
    %p242 = por %p240, %p241
    %p243 = scmp.le.s32.totalorder 1, %s15
    %p244 = scmp.lt.s32.totalorder %s15, 3
    %p245 = pnand %p243, %p244
    %p246 = pneg %p245
    // Predicated region
    $region9: #{moe_block_forward.2} parent=5 // pred_check
      _
    $region10: #{moe_block_forward.2} parent=5 // pred_check_branch
      %248 = sbr.rel (%p245) target = $region12
    $region11: #{moe_block_forward.2} parent=5 // pred_region
      %s249 = ssub.s32 %s15, 1
      // Predicated region
      $region13: #{moe_block_forward.2} parent=11 // pred_check
        %p250 = pneg %p62
      $region14: #{moe_block_forward.2} parent=11 // pred_check_branch
        %252 = sbr.rel (%p250) target = $region16
      $region15: #{moe_block_forward.2} parent=11 // pred_region
        _
      $region16: #{moe_block_forward.2} parent=11 // pred_fallthru
        _
      // Predicated region
      $region17: #{moe_block_forward.2} parent=11 // pred_check
        %p253 = pneg %p83
      $region18: #{moe_block_forward.2} parent=11 // pred_check_branch
        %255 = sbr.rel (%p253) target = $region20
      $region19: #{moe_block_forward.2} parent=11 // pred_region
        _
      $region20: #{moe_block_forward.2} parent=11 // pred_fallthru
        _
      // Predicated region
      $region21: #{moe_block_forward.2} parent=11 // pred_check
        %p256 = pneg %p104
      $region22: #{moe_block_forward.2} parent=11 // pred_check_branch
        %258 = sbr.rel (%p256) target = $region24
      $region23: #{moe_block_forward.2} parent=11 // pred_region
        _
      $region24: #{moe_block_forward.2} parent=11 // pred_fallthru
        _
      // Predicated region
      $region25: #{moe_block_forward.2} parent=11 // pred_check
        %p259 = pneg %p125
      $region26: #{moe_block_forward.2} parent=11 // pred_check_branch
        %261 = sbr.rel (%p259) target = $region28
      $region27: #{moe_block_forward.2} parent=11 // pred_region
        _
      $region28: #{moe_block_forward.2} parent=11 // pred_fallthru
        _
      // Predicated region
      $region29: #{moe_block_forward.2} parent=11 // pred_check
        %p262 = pneg %p146
      $region30: #{moe_block_forward.2} parent=11 // pred_check_branch
        %264 = sbr.rel (%p262) target = $region32
      $region31: #{moe_block_forward.2} parent=11 // pred_region
        _
      $region32: #{moe_block_forward.2} parent=11 // pred_fallthru
        _
      // Predicated region
      $region33: #{moe_block_forward.2} parent=11 // pred_check
        %p265 = pneg %p167
      $region34: #{moe_block_forward.2} parent=11 // pred_check_branch
        %267 = sbr.rel (%p265) target = $region36
      $region35: #{moe_block_forward.2} parent=11 // pred_region
        _
      $region36: #{moe_block_forward.2} parent=11 // pred_fallthru
        _
      // Predicated region
      $region37: #{moe_block_forward.2} parent=11 // pred_check
        %p268 = pneg %p188
      $region38: #{moe_block_forward.2} parent=11 // pred_check_branch
        %270 = sbr.rel (%p268) target = $region40
      $region39: #{moe_block_forward.2} parent=11 // pred_region
        _
      $region40: #{moe_block_forward.2} parent=11 // pred_fallthru
        _
      // Predicated region
      $region41: #{moe_block_forward.2} parent=11 // pred_check
        %p271 = pneg %p209
      $region42: #{moe_block_forward.2} parent=11 // pred_check_branch
        %273 = sbr.rel (%p271) target = $region44
      $region43: #{moe_block_forward.2} parent=11 // pred_region
        _
      $region44: #{moe_block_forward.2} parent=11 // pred_fallthru
        _
    $region12: #{moe_block_forward.2} parent=5 // pred_fallthru
      _
    %p274 = scmp.lt.s32.totalorder %s15, 2
    // Predicated region
    $region45: #{moe_block_forward.2} parent=5 // pred_check
      %p275 = pneg %p274
    $region46: #{moe_block_forward.2} parent=5 // pred_check_branch
      %277 = sbr.rel (%p275) target = $region48
    $region47: #{moe_block_forward.2} parent=5 // pred_region
      // Predicated region
      $region49: #{moe_block_forward.2} parent=47 // pred_check
        %p278 = pneg %p35
      $region50: #{moe_block_forward.2} parent=47 // pred_check_branch
        %280 = sbr.rel (%p278) target = $region52
      $region51: #{moe_block_forward.2} parent=47 // pred_region
        %p281 = scmp.lt.s32.totalorder %s15, 1
        %s282 = scalar_select %p281, %s15, 1
        %s283 = smul.addr %s282, 8
        %s284 = scalar_lea.vmem %s0, %s283
      $region52: #{moe_block_forward.2} parent=47 // pred_fallthru
        _
    $region48: #{moe_block_forward.2} parent=5 // pred_fallthru
      _
    %p285 = scmp.le.s32.totalorder 1, %s15
    %p286 = scmp.lt.s32.totalorder %s15, 3
    %p287 = pnand %p285, %p286
    %p288 = pneg %p287
    // Predicated region
    $region53: #{moe_block_forward.2} parent=5 // pred_check
      _
    $region54: #{moe_block_forward.2} parent=5 // pred_check_branch
      %290 = sbr.rel (%p287) target = $region56
    $region55: #{moe_block_forward.2} parent=5 // pred_region
      %s291 = ssub.s32 %s15, 1
      %p292 = scmp.lt.s32.totalorder %s20, 1
      %s293 = scalar_select %p292, %s20, 1
      %s294 = smul.addr %s293, 8
      %s295 = scalar_lea.vmem %s0, %s294
      %p296 = pneg %p41
      %p297 = pneg %p38
      %p298 = pneg %p62
      %p299 = pneg %p59
      %p300 = pneg %p83
      %p301 = pneg %p80
      %p302 = pneg %p104
      %p303 = pneg %p101
      %p304 = pneg %p125
      %p305 = pneg %p122
      %p306 = pneg %p146
      %p307 = pneg %p143
      %p308 = pneg %p167
      %p309 = pneg %p164
      %p310 = pneg %p188
      %p311 = pneg %p185
      %p312 = pneg %p209
      %p313 = pneg %p206
      %p314 = pneg %p235
      %p315 = pneg %p232
      %p316 = scmp.lt.s32.totalorder %s20, 1
      %s317 = scalar_select %p316, %s20, 1
      %s318 = smul.addr %s317, 8
      %s319 = scalar_lea.vmem %s9, %s318
      %p320 = scmp.lt.s32.totalorder %s20, 1
      %s321 = scalar_select %p320, %s20, 1
      %s322 = smul.addr %s321, 8
      %s323 = scalar_lea.vmem %s0, %s322
      %p324 = scmp.lt.s32.totalorder %s20, 1
      %s325 = scalar_select %p324, %s20, 1
      %s326 = smul.addr %s325, 8
      %s327 = scalar_lea.vmem %s9, %s326
      %v329 = vld [vmem:[%s323] sm:$0xff]
      %vm330 = vcmask 261120
      %v331 = vsel %vm330, %v329, 0.0
      %332 = vadd.xlane.f32.xlu0 %v331
      %v333 = vpop.xlane.xlu0 %332
      %v334 = vrcp.pop 32.0
      %v335 = vmul.f32 %v333, %v334
      %v336 = vsub.f32 %v329, %v335
      %v337 = vmul.f32 %v336, %v336
      %v338 = vsel %vm330, %v337, 0.0
      %339 = vadd.xlane.f32.xlu0 %v338
      %v340 = vpop.xlane.xlu0 %339
      %v341 = vmul.f32 %v340, %v334
      %v342 = vadd.f32 %v341, 1e-05
      %v343 = vrsqrt.pop %v342
      %v344 = vmul.f32 %v336, %v343
      %v345 = vld [vmem:[%s1] sm:$0x1]
      %v347 = vlaneseq
      %v348 = vshrl.u32 %v347, 7
      %v349 = vsub.s32 0, %v348
      %v350 = vrot.slane %v345, %v349
      %v352 = vmul.f32 %v344, %v350
      %v353 = vld [vmem:[%s2] sm:$0x1]
      %v355 = vlaneseq
      %v356 = vshrl.u32 %v355, 7
      %v357 = vsub.s32 0, %v356
      %v358 = vrot.slane %v353, %v357
      %v360 = vadd.f32 %v352, %v358
      %v361 = vpack.c.bf16 %v360, %v360
      %v362 = vld [vmem:[%s5] sm:$0xf]
      %v363 = vld [vmem:[%s5 + $0x4] sm:$0xf]
      %v364 = vld [vmem:[%s5 + $0x8] sm:$0xf]
      %v365 = vld [vmem:[%s5 + $0xc] sm:$0xf]
      %v366 = vld [vmem:[%s6] sm:$0x1]
      %v368 = vlaneseq
      %v369 = vshrl.u32 %v368, 7
      %v370 = vsub.s32 0, %v369
      %v371 = vrot.slane %v366, %v370
      %v377 = vunpack.c.l.b16 %v362
      %v378 = vunpack.c.l.b16 %v363
      %v379 = vunpack.c.l.b16 %v364
      %v380 = vunpack.c.l.b16 %v365
      %v381 = vpack.c.b16 %v378, %v377
      %v382 = vpack.c.b16 %v380, %v379
      %v386 = vsel %vm330, %v361, 0
      %388 = vmatprep.subr.bf16.mxu0 0
      %389 = vmatpush1.bf16.msra.mxu0 %v381
      %390 = vmatprep.subr.bf16.mxu0 0
      %391 = vmatpush1.bf16.msra.mxu0 %v382
      %392 = vmatprep.subr.bf16.mxu0 0
      %393 = vmatpush1.bf16.msra.mxu0 0
      %394 = vmatprep.subr.bf16.mxu0 0
      %395 = vmatpush1.bf16.msra.mxu0 0
      %396 = vmatprep.subr.bf16.mxu0 0
      %397 = vmatpush1.bf16.msra.mxu0 0
      %398 = vmatprep.subr.bf16.mxu0 0
      %399 = vmatpush1.bf16.msra.mxu0 0
      %400 = vmatprep.subr.bf16.mxu0 0
      %401 = vmatpush1.bf16.msra.mxu0 0
      %402 = vmatprep.subr.bf16.mxu0 0
      %403 = vmatpush1.bf16.msra.mxu0 0
      %404 = vmatprep.subr.bf16.mxu0 0
      %405 = vmatpush1.bf16.msra.mxu0 0
      %406 = vmatprep.subr.bf16.mxu0 0
      %407 = vmatpush1.bf16.msra.mxu0 0
      %408 = vmatprep.subr.bf16.mxu0 0
      %409 = vmatpush1.bf16.msra.mxu0 0
      %410 = vmatprep.subr.bf16.mxu0 0
      %411 = vmatpush1.bf16.msra.mxu0 0
      %412 = vmatprep.subr.bf16.mxu0 0
      %413 = vmatpush1.bf16.msra.mxu0 0
      %414 = vmatprep.subr.bf16.mxu0 0
      %415 = vmatpush1.bf16.msra.mxu0 0
      %416 = vmatprep.subr.bf16.mxu0 0
      %417 = vmatpush1.bf16.msra.mxu0 0
      %418 = vmatprep.subr.bf16.mxu0 0
      %419 = vmatpush1.bf16.msra.mxu0 0
      %420 = vmatprep.mubr.bf16.mxu0 0
      %421 = vmatmul.mubr.bf16.gmra.mrb[0].mxu0 %v386
      %v422 = vpop.f32.mrb[0].mxu0
      %v423 = vadd.f32 %v371, %v422
      %v424 = vpop.f32.mrb[0].mxu0
      %v425 = vpop.f32.mrb[0].mxu0
      %v426 = vpop.f32.mrb[0].mxu0
      %427 = vdwg.mxu0
      %429 = vrot.lane.b32.xlu0 %v423, 120
      %v430 = vpop.permute.xlu0 %429
      %432 = vrot.lane.b32.xlu0 %v423, 112
      %v433 = vpop.permute.xlu0 %432
      %435 = vrot.lane.b32.xlu0 %v423, 104
      %v436 = vpop.permute.xlu0 %435
      %v438 = vmul.f32 %v423, 0.35355338
      %v439 = vmul.f32 %v430, 0.35355338
      %v440 = vmul.f32 %v433, 0.35355338
      %v441 = vmul.f32 %v436, 0.35355338
      %v442 = vpack.c.bf16 %v438, %v438
      %v443 = vpack.c.bf16 %v439, %v439
      %v444 = vpack.c.bf16 %v440, %v440
      %v445 = vpack.c.bf16 %v441, %v441
      %v446 = vpack.c.bf16 %v423, %v423
      %v447 = vpack.c.bf16 %v430, %v430
      %v448 = vpack.c.bf16 %v433, %v433
      %v449 = vpack.c.bf16 %v436, %v436
      %451 = vrot.lane.b32.xlu0 %v446, 96
      %v452 = vpop.permute.xlu0 %451
      %vm453 = vcmask 64512
      %v455 = vsel %vm453, %v442, 0
      %v458 = vsel %vm453, %v452, 0
      %460 = vmatprep.subr.bf16.mxu0 0
      %461 = vmatpush1.bf16.xpose.msra.mxu0 %v458
      %462 = vmatprep.subr.bf16.mxu0 0
      %463 = vmatpush1.bf16.xpose.msra.mxu0 0
      %464 = vmatprep.subr.bf16.mxu0 0
      %465 = vmatpush1.bf16.xpose.msra.mxu0 0
      %466 = vmatprep.subr.bf16.mxu0 0
      %467 = vmatpush1.bf16.xpose.msra.mxu0 0
      %468 = vmatprep.subr.bf16.mxu0 0
      %469 = vmatpush1.bf16.xpose.msra.mxu0 0
      %470 = vmatprep.subr.bf16.mxu0 0
      %471 = vmatpush1.bf16.xpose.msra.mxu0 0
      %472 = vmatprep.subr.bf16.mxu0 0
      %473 = vmatpush1.bf16.xpose.msra.mxu0 0
      %474 = vmatprep.subr.bf16.mxu0 0
      %475 = vmatpush1.bf16.xpose.msra.mxu0 0
      %476 = vmatprep.subr.bf16.mxu0 0
      %477 = vmatpush1.bf16.xpose.msra.mxu0 0
      %478 = vmatprep.subr.bf16.mxu0 0
      %479 = vmatpush1.bf16.xpose.msra.mxu0 0
      %480 = vmatprep.subr.bf16.mxu0 0
      %481 = vmatpush1.bf16.xpose.msra.mxu0 0
      %482 = vmatprep.subr.bf16.mxu0 0
      %483 = vmatpush1.bf16.xpose.msra.mxu0 0
      %484 = vmatprep.subr.bf16.mxu0 0
      %485 = vmatpush1.bf16.xpose.msra.mxu0 0
      %486 = vmatprep.subr.bf16.mxu0 0
      %487 = vmatpush1.bf16.xpose.msra.mxu0 0
      %488 = vmatprep.subr.bf16.mxu0 0
      %489 = vmatpush1.bf16.xpose.msra.mxu0 0
      %490 = vmatprep.subr.bf16.mxu0 0
      %491 = vmatpush1.bf16.xpose.msra.mxu0 0
      %492 = vmatprep.mubr.bf16.mxu0 0
      %493 = vmatmul.mubr.bf16.gmra.mrb[0].mxu0 %v455
      %v494 = vpop.f32.mrb[0].mxu0
      %v495 = vadd.f32 0.0, %v494
      %v496 = vpop.f32.mrb[0].mxu0
      %v497 = vpop.f32.mrb[0].mxu0
      %v498 = vpop.f32.mrb[0].mxu0
      %499 = vdwg.mxu0
      %501 = vrot.lane.b32.xlu0 %v447, 96
      %v502 = vpop.permute.xlu0 %501
      %v504 = vsel %vm453, %v443, 0
      %v507 = vsel %vm453, %v502, 0
      %509 = vmatprep.subr.bf16.mxu0 0
      %510 = vmatpush1.bf16.xpose.msra.mxu0 %v507
      %511 = vmatprep.subr.bf16.mxu0 0
      %512 = vmatpush1.bf16.xpose.msra.mxu0 0
      %513 = vmatprep.subr.bf16.mxu0 0
      %514 = vmatpush1.bf16.xpose.msra.mxu0 0
      %515 = vmatprep.subr.bf16.mxu0 0
      %516 = vmatpush1.bf16.xpose.msra.mxu0 0
      %517 = vmatprep.subr.bf16.mxu0 0
      %518 = vmatpush1.bf16.xpose.msra.mxu0 0
      %519 = vmatprep.subr.bf16.mxu0 0
      %520 = vmatpush1.bf16.xpose.msra.mxu0 0
      %521 = vmatprep.subr.bf16.mxu0 0
      %522 = vmatpush1.bf16.xpose.msra.mxu0 0
      %523 = vmatprep.subr.bf16.mxu0 0
      %524 = vmatpush1.bf16.xpose.msra.mxu0 0
      %525 = vmatprep.subr.bf16.mxu0 0
      %526 = vmatpush1.bf16.xpose.msra.mxu0 0
      %527 = vmatprep.subr.bf16.mxu0 0
      %528 = vmatpush1.bf16.xpose.msra.mxu0 0
      %529 = vmatprep.subr.bf16.mxu0 0
      %530 = vmatpush1.bf16.xpose.msra.mxu0 0
      %531 = vmatprep.subr.bf16.mxu0 0
      %532 = vmatpush1.bf16.xpose.msra.mxu0 0
      %533 = vmatprep.subr.bf16.mxu0 0
      %534 = vmatpush1.bf16.xpose.msra.mxu0 0
      %535 = vmatprep.subr.bf16.mxu0 0
      %536 = vmatpush1.bf16.xpose.msra.mxu0 0
      %537 = vmatprep.subr.bf16.mxu0 0
      %538 = vmatpush1.bf16.xpose.msra.mxu0 0
      %539 = vmatprep.subr.bf16.mxu0 0
      %540 = vmatpush1.bf16.xpose.msra.mxu0 0
      %541 = vmatprep.mubr.bf16.mxu0 0
      %542 = vmatmul.mubr.bf16.gmra.mrb[0].mxu0 %v504
      %v543 = vpop.f32.mrb[0].mxu0
      %v544 = vadd.f32 0.0, %v543
      %v545 = vpop.f32.mrb[0].mxu0
      %v546 = vpop.f32.mrb[0].mxu0
      %v547 = vpop.f32.mrb[0].mxu0
      %548 = vdwg.mxu0
      %550 = vrot.lane.b32.xlu0 %v448, 96
      %v551 = vpop.permute.xlu0 %550
      %v553 = vsel %vm453, %v444, 0
      %v556 = vsel %vm453, %v551, 0
      %558 = vmatprep.subr.bf16.mxu0 0
      %559 = vmatpush1.bf16.xpose.msra.mxu0 %v556
      %560 = vmatprep.subr.bf16.mxu0 0
      %561 = vmatpush1.bf16.xpose.msra.mxu0 0
      %562 = vmatprep.subr.bf16.mxu0 0
      %563 = vmatpush1.bf16.xpose.msra.mxu0 0
      %564 = vmatprep.subr.bf16.mxu0 0
      %565 = vmatpush1.bf16.xpose.msra.mxu0 0
      %566 = vmatprep.subr.bf16.mxu0 0
      %567 = vmatpush1.bf16.xpose.msra.mxu0 0
      %568 = vmatprep.subr.bf16.mxu0 0
      %569 = vmatpush1.bf16.xpose.msra.mxu0 0
      %570 = vmatprep.subr.bf16.mxu0 0
      %571 = vmatpush1.bf16.xpose.msra.mxu0 0
      %572 = vmatprep.subr.bf16.mxu0 0
      %573 = vmatpush1.bf16.xpose.msra.mxu0 0
      %574 = vmatprep.subr.bf16.mxu0 0
      %575 = vmatpush1.bf16.xpose.msra.mxu0 0
      %576 = vmatprep.subr.bf16.mxu0 0
      %577 = vmatpush1.bf16.xpose.msra.mxu0 0
      %578 = vmatprep.subr.bf16.mxu0 0
      %579 = vmatpush1.bf16.xpose.msra.mxu0 0
      %580 = vmatprep.subr.bf16.mxu0 0
      %581 = vmatpush1.bf16.xpose.msra.mxu0 0
      %582 = vmatprep.subr.bf16.mxu0 0
      %583 = vmatpush1.bf16.xpose.msra.mxu0 0
      %584 = vmatprep.subr.bf16.mxu0 0
      %585 = vmatpush1.bf16.xpose.msra.mxu0 0
      %586 = vmatprep.subr.bf16.mxu0 0
      %587 = vmatpush1.bf16.xpose.msra.mxu0 0
      %588 = vmatprep.subr.bf16.mxu0 0
      %589 = vmatpush1.bf16.xpose.msra.mxu0 0
      %590 = vmatprep.mubr.bf16.mxu0 0
      %591 = vmatmul.mubr.bf16.gmra.mrb[0].mxu0 %v553
      %v592 = vpop.f32.mrb[0].mxu0
      %v593 = vadd.f32 0.0, %v592
      %v594 = vpop.f32.mrb[0].mxu0
      %v595 = vpop.f32.mrb[0].mxu0
      %v596 = vpop.f32.mrb[0].mxu0
      %597 = vdwg.mxu0
      %599 = vrot.lane.b32.xlu0 %v449, 96
      %v600 = vpop.permute.xlu0 %599
      %v602 = vsel %vm453, %v445, 0
      %v605 = vsel %vm453, %v600, 0
      %607 = vmatprep.subr.bf16.mxu0 0
      %608 = vmatpush1.bf16.xpose.msra.mxu0 %v605
      %609 = vmatprep.subr.bf16.mxu0 0
      %610 = vmatpush1.bf16.xpose.msra.mxu0 0
      %611 = vmatprep.subr.bf16.mxu0 0
      %612 = vmatpush1.bf16.xpose.msra.mxu0 0
      %613 = vmatprep.subr.bf16.mxu0 0
      %614 = vmatpush1.bf16.xpose.msra.mxu0 0
      %615 = vmatprep.subr.bf16.mxu0 0
      %616 = vmatpush1.bf16.xpose.msra.mxu0 0
      %617 = vmatprep.subr.bf16.mxu0 0
      %618 = vmatpush1.bf16.xpose.msra.mxu0 0
      %619 = vmatprep.subr.bf16.mxu0 0
      %620 = vmatpush1.bf16.xpose.msra.mxu0 0
      %621 = vmatprep.subr.bf16.mxu0 0
      %622 = vmatpush1.bf16.xpose.msra.mxu0 0
      %623 = vmatprep.subr.bf16.mxu0 0
      %624 = vmatpush1.bf16.xpose.msra.mxu0 0
      %625 = vmatprep.subr.bf16.mxu0 0
      %626 = vmatpush1.bf16.xpose.msra.mxu0 0
      %627 = vmatprep.subr.bf16.mxu0 0
      %628 = vmatpush1.bf16.xpose.msra.mxu0 0
      %629 = vmatprep.subr.bf16.mxu0 0
      %630 = vmatpush1.bf16.xpose.msra.mxu0 0
      %631 = vmatprep.subr.bf16.mxu0 0
      %632 = vmatpush1.bf16.xpose.msra.mxu0 0
      %633 = vmatprep.subr.bf16.mxu0 0
      %634 = vmatpush1.bf16.xpose.msra.mxu0 0
      %635 = vmatprep.subr.bf16.mxu0 0
      %636 = vmatpush1.bf16.xpose.msra.mxu0 0
      %637 = vmatprep.subr.bf16.mxu0 0
      %638 = vmatpush1.bf16.xpose.msra.mxu0 0
      %639 = vmatprep.mubr.bf16.mxu0 0
      %640 = vmatmul.mubr.bf16.gmra.mrb[0].mxu0 %v602
      %v641 = vpop.f32.mrb[0].mxu0
      %v642 = vadd.f32 0.0, %v641
      %v643 = vpop.f32.mrb[0].mxu0
      %v644 = vpop.f32.mrb[0].mxu0
      %v645 = vpop.f32.mrb[0].mxu0
      %646 = vdwg.mxu0
      %v647 = vlaneseq
      %v648 = vshrl.u32 %v647, 7
      %v649 = vlaneseq
      %v650 = vand.u32 %v649, 127
      %vm651 = vcmp.ge.s32.totalorder %v648, %v650
      %v652 = vsel %vm651, 1, 0
      %vm653 = vcmp.eq.s32.totalorder %v652, 1
      %v654 = vsel %vm653, %v495, -1e+30
      %v655 = vsel %vm653, %v544, -1e+30
      %v656 = vsel %vm653, %v593, -1e+30
      %v657 = vsel %vm653, %v642, -1e+30
      %v658 = vsel %vm453, %v654, -inf
      %659 = vmax.xlane.f32.xlu0 %v658
      %v660 = vpop.xlane.xlu0 %659
      %v661 = vsel %vm453, %v655, -inf
      %662 = vmax.xlane.f32.xlu0 %v661
      %v663 = vpop.xlane.xlu0 %662
      %v664 = vsel %vm453, %v656, -inf
      %665 = vmax.xlane.f32.xlu0 %v664
      %v666 = vpop.xlane.xlu0 %665
      %v667 = vsel %vm453, %v657, -inf
      %668 = vmax.xlane.f32.xlu0 %v667
      %v669 = vpop.xlane.xlu0 %668
      %v670 = vsub.f32 %v654, %v660
      %v671 = vsub.f32 %v655, %v663
      %v672 = vsub.f32 %v656, %v666
      %v673 = vsub.f32 %v657, %v669
      %v674 = vmul.f32 %v670, 1.442695
      %v675 = vpow.pop %v674
      %v676 = vmul.f32 %v671, 1.442695
      %v677 = vpow.pop %v676
      %v678 = vmul.f32 %v672, 1.442695
      %v679 = vpow.pop %v678
      %v680 = vmul.f32 %v673, 1.442695
      %v681 = vpow.pop %v680
      %v682 = vsel %vm453, %v675, 0.0
      %683 = vadd.xlane.f32.xlu0 %v682
      %v684 = vpop.xlane.xlu0 %683
      %v685 = vsel %vm453, %v677, 0.0
      %686 = vadd.xlane.f32.xlu0 %v685
      %v687 = vpop.xlane.xlu0 %686
      %v688 = vsel %vm453, %v679, 0.0
      %689 = vadd.xlane.f32.xlu0 %v688
      %v690 = vpop.xlane.xlu0 %689
      %v691 = vsel %vm453, %v681, 0.0
      %692 = vadd.xlane.f32.xlu0 %v691
      %v693 = vpop.xlane.xlu0 %692
      %v694 = vrcp.pop %v684
      %v695 = vrcp.pop %v687
      %v696 = vrcp.pop %v690
      %v697 = vrcp.pop %v693
      %v698 = vmul.f32 %v675, %v694
      %v699 = vmul.f32 %v677, %v695
      %v700 = vmul.f32 %v679, %v696
      %v701 = vmul.f32 %v681, %v697
      %v702 = vpack.c.bf16 %v698, %v698
      %v703 = vpack.c.bf16 %v699, %v699
      %v704 = vpack.c.bf16 %v700, %v700
      %v705 = vpack.c.bf16 %v701, %v701
      %706 = vrot.lane.b32.xlu0 %v446, 64
      %v707 = vpop.permute.xlu0 %706
      %v709 = vsel %vm453, %v702, 0
      %vm711 = vcmask 1043456
      %v713 = vsel %vm711, %v707, 0
      %715 = vmatprep.subr.bf16.mxu0 0
      %716 = vmatpush1.bf16.msra.mxu0 %v713
      %717 = vmatprep.subr.bf16.mxu0 0
      %718 = vmatpush1.bf16.msra.mxu0 0
      %719 = vmatprep.subr.bf16.mxu0 0
      %720 = vmatpush1.bf16.msra.mxu0 0
      %721 = vmatprep.subr.bf16.mxu0 0
      %722 = vmatpush1.bf16.msra.mxu0 0
      %723 = vmatprep.subr.bf16.mxu0 0
      %724 = vmatpush1.bf16.msra.mxu0 0
      %725 = vmatprep.subr.bf16.mxu0 0
      %726 = vmatpush1.bf16.msra.mxu0 0
      %727 = vmatprep.subr.bf16.mxu0 0
      %728 = vmatpush1.bf16.msra.mxu0 0
      %729 = vmatprep.subr.bf16.mxu0 0
      %730 = vmatpush1.bf16.msra.mxu0 0
      %731 = vmatprep.subr.bf16.mxu0 0
      %732 = vmatpush1.bf16.msra.mxu0 0
      %733 = vmatprep.subr.bf16.mxu0 0
      %734 = vmatpush1.bf16.msra.mxu0 0
      %735 = vmatprep.subr.bf16.mxu0 0
      %736 = vmatpush1.bf16.msra.mxu0 0
      %737 = vmatprep.subr.bf16.mxu0 0
      %738 = vmatpush1.bf16.msra.mxu0 0
      %739 = vmatprep.subr.bf16.mxu0 0
      %740 = vmatpush1.bf16.msra.mxu0 0
      %741 = vmatprep.subr.bf16.mxu0 0
      %742 = vmatpush1.bf16.msra.mxu0 0
      %743 = vmatprep.subr.bf16.mxu0 0
      %744 = vmatpush1.bf16.msra.mxu0 0
      %745 = vmatprep.subr.bf16.mxu0 0
      %746 = vmatpush1.bf16.msra.mxu0 0
      %747 = vmatprep.mubr.bf16.mxu0 0
      %748 = vmatmul.mubr.bf16.gmra.mrb[0].mxu0 %v709
      %v749 = vpop.f32.mrb[0].mxu0
      %v750 = vadd.f32 0.0, %v749
      %v751 = vpop.f32.mrb[0].mxu0
      %v752 = vpop.f32.mrb[0].mxu0
      %v753 = vpop.f32.mrb[0].mxu0
      %754 = vdwg.mxu0
      %755 = vrot.lane.b32.xlu0 %v447, 64
      %v756 = vpop.permute.xlu0 %755
      %v758 = vsel %vm453, %v703, 0
      %v761 = vsel %vm711, %v756, 0
      %763 = vmatprep.subr.bf16.mxu0 0
      %764 = vmatpush1.bf16.msra.mxu0 %v761
      %765 = vmatprep.subr.bf16.mxu0 0
      %766 = vmatpush1.bf16.msra.mxu0 0
      %767 = vmatprep.subr.bf16.mxu0 0
      %768 = vmatpush1.bf16.msra.mxu0 0
      %769 = vmatprep.subr.bf16.mxu0 0
      %770 = vmatpush1.bf16.msra.mxu0 0
      %771 = vmatprep.subr.bf16.mxu0 0
      %772 = vmatpush1.bf16.msra.mxu0 0
      %773 = vmatprep.subr.bf16.mxu0 0
      %774 = vmatpush1.bf16.msra.mxu0 0
      %775 = vmatprep.subr.bf16.mxu0 0
      %776 = vmatpush1.bf16.msra.mxu0 0
      %777 = vmatprep.subr.bf16.mxu0 0
      %778 = vmatpush1.bf16.msra.mxu0 0
      %779 = vmatprep.subr.bf16.mxu0 0
      %780 = vmatpush1.bf16.msra.mxu0 0
      %781 = vmatprep.subr.bf16.mxu0 0
      %782 = vmatpush1.bf16.msra.mxu0 0
      %783 = vmatprep.subr.bf16.mxu0 0
      %784 = vmatpush1.bf16.msra.mxu0 0
      %785 = vmatprep.subr.bf16.mxu0 0
      %786 = vmatpush1.bf16.msra.mxu0 0
      %787 = vmatprep.subr.bf16.mxu0 0
      %788 = vmatpush1.bf16.msra.mxu0 0
      %789 = vmatprep.subr.bf16.mxu0 0
      %790 = vmatpush1.bf16.msra.mxu0 0
      %791 = vmatprep.subr.bf16.mxu0 0
      %792 = vmatpush1.bf16.msra.mxu0 0
      %793 = vmatprep.subr.bf16.mxu0 0
      %794 = vmatpush1.bf16.msra.mxu0 0
      %795 = vmatprep.mubr.bf16.mxu0 0
      %796 = vmatmul.mubr.bf16.gmra.mrb[0].mxu0 %v758
      %v797 = vpop.f32.mrb[0].mxu0
      %v798 = vadd.f32 0.0, %v797
      %v799 = vpop.f32.mrb[0].mxu0
      %v800 = vpop.f32.mrb[0].mxu0
      %v801 = vpop.f32.mrb[0].mxu0
      %802 = vdwg.mxu0
      %803 = vrot.lane.b32.xlu0 %v448, 64
      %v804 = vpop.permute.xlu0 %803
      %v806 = vsel %vm453, %v704, 0
      %v809 = vsel %vm711, %v804, 0
      %811 = vmatprep.subr.bf16.mxu0 0
      %812 = vmatpush1.bf16.msra.mxu0 %v809
      %813 = vmatprep.subr.bf16.mxu0 0
      %814 = vmatpush1.bf16.msra.mxu0 0
      %815 = vmatprep.subr.bf16.mxu0 0
      %816 = vmatpush1.bf16.msra.mxu0 0
      %817 = vmatprep.subr.bf16.mxu0 0
      %818 = vmatpush1.bf16.msra.mxu0 0
      %819 = vmatprep.subr.bf16.mxu0 0
      %820 = vmatpush1.bf16.msra.mxu0 0
      %821 = vmatprep.subr.bf16.mxu0 0
      %822 = vmatpush1.bf16.msra.mxu0 0
      %823 = vmatprep.subr.bf16.mxu0 0
      %824 = vmatpush1.bf16.msra.mxu0 0
      %825 = vmatprep.subr.bf16.mxu0 0
      %826 = vmatpush1.bf16.msra.mxu0 0
      %827 = vmatprep.subr.bf16.mxu0 0
      %828 = vmatpush1.bf16.msra.mxu0 0
      %829 = vmatprep.subr.bf16.mxu0 0
      %830 = vmatpush1.bf16.msra.mxu0 0
      %831 = vmatprep.subr.bf16.mxu0 0
      %832 = vmatpush1.bf16.msra.mxu0 0
      %833 = vmatprep.subr.bf16.mxu0 0
      %834 = vmatpush1.bf16.msra.mxu0 0
      %835 = vmatprep.subr.bf16.mxu0 0
      %836 = vmatpush1.bf16.msra.mxu0 0
      %837 = vmatprep.subr.bf16.mxu0 0
      %838 = vmatpush1.bf16.msra.mxu0 0
      %839 = vmatprep.subr.bf16.mxu0 0
      %840 = vmatpush1.bf16.msra.mxu0 0
      %841 = vmatprep.subr.bf16.mxu0 0
      %842 = vmatpush1.bf16.msra.mxu0 0
      %843 = vmatprep.mubr.bf16.mxu0 0
      %844 = vmatmul.mubr.bf16.gmra.mrb[0].mxu0 %v806
      %v845 = vpop.f32.mrb[0].mxu0
      %v846 = vadd.f32 0.0, %v845
      %v847 = vpop.f32.mrb[0].mxu0
      %v848 = vpop.f32.mrb[0].mxu0
      %v849 = vpop.f32.mrb[0].mxu0
      %850 = vdwg.mxu0
      %851 = vrot.lane.b32.xlu0 %v449, 64
      %v852 = vpop.permute.xlu0 %851
      %v854 = vsel %vm453, %v705, 0
      %v857 = vsel %vm711, %v852, 0
      %859 = vmatprep.subr.bf16.mxu0 0
      %860 = vmatpush1.bf16.msra.mxu0 %v857
      %861 = vmatprep.subr.bf16.mxu0 0
      %862 = vmatpush1.bf16.msra.mxu0 0
      %863 = vmatprep.subr.bf16.mxu0 0
      %864 = vmatpush1.bf16.msra.mxu0 0
      %865 = vmatprep.subr.bf16.mxu0 0
      %866 = vmatpush1.bf16.msra.mxu0 0
      %867 = vmatprep.subr.bf16.mxu0 0
      %868 = vmatpush1.bf16.msra.mxu0 0
      %869 = vmatprep.subr.bf16.mxu0 0
      %870 = vmatpush1.bf16.msra.mxu0 0
      %871 = vmatprep.subr.bf16.mxu0 0
      %872 = vmatpush1.bf16.msra.mxu0 0
      %873 = vmatprep.subr.bf16.mxu0 0
      %874 = vmatpush1.bf16.msra.mxu0 0
      %875 = vmatprep.subr.bf16.mxu0 0
      %876 = vmatpush1.bf16.msra.mxu0 0
      %877 = vmatprep.subr.bf16.mxu0 0
      %878 = vmatpush1.bf16.msra.mxu0 0
      %879 = vmatprep.subr.bf16.mxu0 0
      %880 = vmatpush1.bf16.msra.mxu0 0
      %881 = vmatprep.subr.bf16.mxu0 0
      %882 = vmatpush1.bf16.msra.mxu0 0
      %883 = vmatprep.subr.bf16.mxu0 0
      %884 = vmatpush1.bf16.msra.mxu0 0
      %885 = vmatprep.subr.bf16.mxu0 0
      %886 = vmatpush1.bf16.msra.mxu0 0
      %887 = vmatprep.subr.bf16.mxu0 0
      %888 = vmatpush1.bf16.msra.mxu0 0
      %889 = vmatprep.subr.bf16.mxu0 0
      %890 = vmatpush1.bf16.msra.mxu0 0
      %891 = vmatprep.mubr.bf16.mxu0 0
      %892 = vmatmul.mubr.bf16.gmra.mrb[0].mxu0 %v854
      %v893 = vpop.f32.mrb[0].mxu0
      %v894 = vadd.f32 0.0, %v893
      %v895 = vpop.f32.mrb[0].mxu0
      %v896 = vpop.f32.mrb[0].mxu0
      %v897 = vpop.f32.mrb[0].mxu0
      %898 = vdwg.mxu0
      %v899 = vpack.c.bf16 %v750, %v750
      %v900 = vpack.c.bf16 %v798, %v798
      %v901 = vpack.c.bf16 %v846, %v846
      %v902 = vpack.c.bf16 %v894, %v894
      %v903 = vld [vmem:[%s7] sm:$0xf]
      %v904 = vld [vmem:[%s7 + $0x4] sm:$0xf]
      %v905 = vld [vmem:[%s7 + $0x8] sm:$0xf]
      %v906 = vld [vmem:[%s7 + $0xc] sm:$0xf]
      %v908 = vsel %vm453, %v899, 0
      %v911 = vsel %vm711, %v903, 0
      %913 = vmatprep.subr.bf16.mxu0 0
      %914 = vmatpush1.bf16.msra.mxu0 %v911
      %915 = vmatprep.subr.bf16.mxu0 0
      %916 = vmatpush1.bf16.msra.mxu0 0
      %917 = vmatprep.subr.bf16.mxu0 0
      %918 = vmatpush1.bf16.msra.mxu0 0
      %919 = vmatprep.subr.bf16.mxu0 0
      %920 = vmatpush1.bf16.msra.mxu0 0
      %921 = vmatprep.subr.bf16.mxu0 0
      %922 = vmatpush1.bf16.msra.mxu0 0
      %923 = vmatprep.subr.bf16.mxu0 0
      %924 = vmatpush1.bf16.msra.mxu0 0
      %925 = vmatprep.subr.bf16.mxu0 0
      %926 = vmatpush1.bf16.msra.mxu0 0
      %927 = vmatprep.subr.bf16.mxu0 0
      %928 = vmatpush1.bf16.msra.mxu0 0
      %929 = vmatprep.subr.bf16.mxu0 0
      %930 = vmatpush1.bf16.msra.mxu0 0
      %931 = vmatprep.subr.bf16.mxu0 0
      %932 = vmatpush1.bf16.msra.mxu0 0
      %933 = vmatprep.subr.bf16.mxu0 0
      %934 = vmatpush1.bf16.msra.mxu0 0
      %935 = vmatprep.subr.bf16.mxu0 0
      %936 = vmatpush1.bf16.msra.mxu0 0
      %937 = vmatprep.subr.bf16.mxu0 0
      %938 = vmatpush1.bf16.msra.mxu0 0
      %939 = vmatprep.subr.bf16.mxu0 0
      %940 = vmatpush1.bf16.msra.mxu0 0
      %941 = vmatprep.subr.bf16.mxu0 0
      %942 = vmatpush1.bf16.msra.mxu0 0
      %943 = vmatprep.subr.bf16.mxu0 0
      %944 = vmatpush1.bf16.msra.mxu0 0
      %945 = vmatprep.mubr.bf16.mxu0 0
      %946 = vmatmul.mubr.bf16.gmra.mrb[0].mxu0 %v908
      %v947 = vpop.f32.mrb[0].mxu0
      %v948 = vadd.f32 0.0, %v947
      %v949 = vpop.f32.mrb[0].mxu0
      %v950 = vpop.f32.mrb[0].mxu0
      %v951 = vpop.f32.mrb[0].mxu0
      %952 = vdwg.mxu0
      %v954 = vsel %vm453, %v900, 0
      %v957 = vsel %vm711, %v904, 0
      %959 = vmatprep.subr.bf16.mxu0 0
      %960 = vmatpush1.bf16.msra.mxu0 %v957
      %961 = vmatprep.subr.bf16.mxu0 0
      %962 = vmatpush1.bf16.msra.mxu0 0
      %963 = vmatprep.subr.bf16.mxu0 0
      %964 = vmatpush1.bf16.msra.mxu0 0
      %965 = vmatprep.subr.bf16.mxu0 0
      %966 = vmatpush1.bf16.msra.mxu0 0
      %967 = vmatprep.subr.bf16.mxu0 0
      %968 = vmatpush1.bf16.msra.mxu0 0
      %969 = vmatprep.subr.bf16.mxu0 0
      %970 = vmatpush1.bf16.msra.mxu0 0
      %971 = vmatprep.subr.bf16.mxu0 0
      %972 = vmatpush1.bf16.msra.mxu0 0
      %973 = vmatprep.subr.bf16.mxu0 0
      %974 = vmatpush1.bf16.msra.mxu0 0
      %975 = vmatprep.subr.bf16.mxu0 0
      %976 = vmatpush1.bf16.msra.mxu0 0
      %977 = vmatprep.subr.bf16.mxu0 0
      %978 = vmatpush1.bf16.msra.mxu0 0
      %979 = vmatprep.subr.bf16.mxu0 0
      %980 = vmatpush1.bf16.msra.mxu0 0
      %981 = vmatprep.subr.bf16.mxu0 0
      %982 = vmatpush1.bf16.msra.mxu0 0
      %983 = vmatprep.subr.bf16.mxu0 0
      %984 = vmatpush1.bf16.msra.mxu0 0
      %985 = vmatprep.subr.bf16.mxu0 0
      %986 = vmatpush1.bf16.msra.mxu0 0
      %987 = vmatprep.subr.bf16.mxu0 0
      %988 = vmatpush1.bf16.msra.mxu0 0
      %989 = vmatprep.subr.bf16.mxu0 0
      %990 = vmatpush1.bf16.msra.mxu0 0
      %991 = vmatprep.mubr.bf16.mxu0 0
      %992 = vmatmul.mubr.bf16.gmra.mrb[0].mxu0 %v954
      %v993 = vpop.f32.mrb[0].mxu0
      %v994 = vadd.f32 0.0, %v993
      %v995 = vpop.f32.mrb[0].mxu0
      %v996 = vpop.f32.mrb[0].mxu0
      %v997 = vpop.f32.mrb[0].mxu0
      %998 = vdwg.mxu0
      %v1000 = vsel %vm453, %v901, 0
      %v1003 = vsel %vm711, %v905, 0
      %1005 = vmatprep.subr.bf16.mxu0 0
      %1006 = vmatpush1.bf16.msra.mxu0 %v1003
      %1007 = vmatprep.subr.bf16.mxu0 0
      %1008 = vmatpush1.bf16.msra.mxu0 0
      %1009 = vmatprep.subr.bf16.mxu0 0
      %1010 = vmatpush1.bf16.msra.mxu0 0
      %1011 = vmatprep.subr.bf16.mxu0 0
      %1012 = vmatpush1.bf16.msra.mxu0 0
      %1013 = vmatprep.subr.bf16.mxu0 0
      %1014 = vmatpush1.bf16.msra.mxu0 0
      %1015 = vmatprep.subr.bf16.mxu0 0
      %1016 = vmatpush1.bf16.msra.mxu0 0
      %1017 = vmatprep.subr.bf16.mxu0 0
      %1018 = vmatpush1.bf16.msra.mxu0 0
      %1019 = vmatprep.subr.bf16.mxu0 0
      %1020 = vmatpush1.bf16.msra.mxu0 0
      %1021 = vmatprep.subr.bf16.mxu0 0
      %1022 = vmatpush1.bf16.msra.mxu0 0
      %1023 = vmatprep.subr.bf16.mxu0 0
      %1024 = vmatpush1.bf16.msra.mxu0 0
      %1025 = vmatprep.subr.bf16.mxu0 0
      %1026 = vmatpush1.bf16.msra.mxu0 0
      %1027 = vmatprep.subr.bf16.mxu0 0
      %1028 = vmatpush1.bf16.msra.mxu0 0
      %1029 = vmatprep.subr.bf16.mxu0 0
      %1030 = vmatpush1.bf16.msra.mxu0 0
      %1031 = vmatprep.subr.bf16.mxu0 0
      %1032 = vmatpush1.bf16.msra.mxu0 0
      %1033 = vmatprep.subr.bf16.mxu0 0
      %1034 = vmatpush1.bf16.msra.mxu0 0
      %1035 = vmatprep.subr.bf16.mxu0 0
      %1036 = vmatpush1.bf16.msra.mxu0 0
      %1037 = vmatprep.mubr.bf16.mxu0 0
      %1038 = vmatmul.mubr.bf16.gmra.mrb[0].mxu0 %v1000
      %v1039 = vpop.f32.mrb[0].mxu0
      %v1040 = vadd.f32 0.0, %v1039
      %v1041 = vpop.f32.mrb[0].mxu0
      %v1042 = vpop.f32.mrb[0].mxu0
      %v1043 = vpop.f32.mrb[0].mxu0
      %1044 = vdwg.mxu0
      %v1046 = vsel %vm453, %v902, 0
      %v1049 = vsel %vm711, %v906, 0
      %1051 = vmatprep.subr.bf16.mxu0 0
      %1052 = vmatpush1.bf16.msra.mxu0 %v1049
      %1053 = vmatprep.subr.bf16.mxu0 0
      %1054 = vmatpush1.bf16.msra.mxu0 0
      %1055 = vmatprep.subr.bf16.mxu0 0
      %1056 = vmatpush1.bf16.msra.mxu0 0
      %1057 = vmatprep.subr.bf16.mxu0 0
      %1058 = vmatpush1.bf16.msra.mxu0 0
      %1059 = vmatprep.subr.bf16.mxu0 0
      %1060 = vmatpush1.bf16.msra.mxu0 0
      %1061 = vmatprep.subr.bf16.mxu0 0
      %1062 = vmatpush1.bf16.msra.mxu0 0
      %1063 = vmatprep.subr.bf16.mxu0 0
      %1064 = vmatpush1.bf16.msra.mxu0 0
      %1065 = vmatprep.subr.bf16.mxu0 0
      %1066 = vmatpush1.bf16.msra.mxu0 0
      %1067 = vmatprep.subr.bf16.mxu0 0
      %1068 = vmatpush1.bf16.msra.mxu0 0
      %1069 = vmatprep.subr.bf16.mxu0 0
      %1070 = vmatpush1.bf16.msra.mxu0 0
      %1071 = vmatprep.subr.bf16.mxu0 0
      %1072 = vmatpush1.bf16.msra.mxu0 0
      %1073 = vmatprep.subr.bf16.mxu0 0
      %1074 = vmatpush1.bf16.msra.mxu0 0
      %1075 = vmatprep.subr.bf16.mxu0 0
      %1076 = vmatpush1.bf16.msra.mxu0 0
      %1077 = vmatprep.subr.bf16.mxu0 0
      %1078 = vmatpush1.bf16.msra.mxu0 0
      %1079 = vmatprep.subr.bf16.mxu0 0
      %1080 = vmatpush1.bf16.msra.mxu0 0
      %1081 = vmatprep.subr.bf16.mxu0 0
      %1082 = vmatpush1.bf16.msra.mxu0 0
      %1083 = vmatprep.mubr.bf16.mxu0 0
      %1084 = vmatmul.mubr.bf16.gmra.mrb[0].mxu0 %v1046
      %v1085 = vpop.f32.mrb[0].mxu0
      %v1086 = vadd.f32 0.0, %v1085
      %v1087 = vpop.f32.mrb[0].mxu0
      %v1088 = vpop.f32.mrb[0].mxu0
      %v1089 = vpop.f32.mrb[0].mxu0
      %1090 = vdwg.mxu0
      %v1091 = vadd.f32 %v948, %v994
      %v1092 = vadd.f32 %v1091, %v1040
      %v1093 = vadd.f32 %v1092, %v1086
      %v1094 = vld [vmem:[%s8] sm:$0x1]
      %v1096 = vlaneseq
      %v1097 = vshrl.u32 %v1096, 7
      %v1098 = vsub.s32 0, %v1097
      %v1099 = vrot.slane %v1094, %v1098
      %v1101 = vadd.f32 %v1093, %v1099
      %v1102 = vadd.f32 %v329, %v1101
      %v1103 = vsel %vm330, %v1102, 0.0
      %1104 = vadd.xlane.f32.xlu0 %v1103
      %v1105 = vpop.xlane.xlu0 %1104
      %v1106 = vmul.f32 %v1105, %v334
      %v1107 = vsub.f32 %v1102, %v1106
      %v1108 = vmul.f32 %v1107, %v1107
      %v1109 = vsel %vm330, %v1108, 0.0
      %1110 = vadd.xlane.f32.xlu0 %v1109
      %v1111 = vpop.xlane.xlu0 %1110
      %v1112 = vmul.f32 %v1111, %v334
      %v1113 = vadd.f32 %v1112, 1e-05
      %v1114 = vrsqrt.pop %v1113
      %v1115 = vmul.f32 %v1107, %v1114
      %v1116 = vld [vmem:[%s3] sm:$0x1]
      %v1118 = vlaneseq
      %v1119 = vshrl.u32 %v1118, 7
      %v1120 = vsub.s32 0, %v1119
      %v1121 = vrot.slane %v1116, %v1120
      %v1123 = vmul.f32 %v1115, %v1121
      %v1124 = vld [vmem:[%s4] sm:$0x1]
      %v1126 = vlaneseq
      %v1127 = vshrl.u32 %v1126, 7
      %v1128 = vsub.s32 0, %v1127
      %v1129 = vrot.slane %v1124, %v1128
      %v1131 = vadd.f32 %v1123, %v1129
      %1132 = vst.msk [vmem:[%s327] sm:$0xff] %vm330, %v1131
      %p1133 = scmp.lt.s32.totalorder %s20, 1
      %s1134 = scalar_select %p1133, %s20, 1
      %s1135 = smul.addr %s1134, 8
      %s1136 = scalar_lea.vmem %s9, %s1135
      // Predicated region
      $region57: #{moe_block_forward.2} parent=55 // pred_check
        %p1137 = pneg %p232
      $region58: #{moe_block_forward.2} parent=55 // pred_check_branch
        %1139 = sbr.rel (%p1137) target = $region60
      $region59: #{moe_block_forward.2} parent=55 // pred_region
        _
      $region60: #{moe_block_forward.2} parent=55 // pred_fallthru
        _
    $region56: #{moe_block_forward.2} parent=5 // pred_fallthru
      _
    %p1140 = scmp.le.s32.totalorder 2, %s15
    // Predicated region
    $region61: #{moe_block_forward.2} parent=5 // pred_check
      %p1141 = pneg %p1140
    $region62: #{moe_block_forward.2} parent=5 // pred_check_branch
      %1143 = sbr.rel (%p1141) target = $region64
    $region63: #{moe_block_forward.2} parent=5 // pred_region
      %s1144 = ssub.s32 %s15, 2
      // Predicated region
      $region65: #{moe_block_forward.2} parent=63 // pred_check
        %p1145 = pneg %p238
      $region66: #{moe_block_forward.2} parent=63 // pred_check_branch
        %1147 = sbr.rel (%p1145) target = $region68
      $region67: #{moe_block_forward.2} parent=63 // pred_region
        %p1148 = scmp.lt.s32.totalorder %s21, 1
        %s1149 = scalar_select %p1148, %s21, 1
        %s1150 = smul.addr %s1149, 8
        %s1151 = scalar_lea.vmem %s9, %s1150
      $region68: #{moe_block_forward.2} parent=63 // pred_fallthru
        _
    $region64: #{moe_block_forward.2} parent=5 // pred_fallthru
      _
  $region6: #{moe_block_forward.2} parent=0 // loop_footer
    %s19 = sadd.s32 1, %s15
  $region7: #{moe_block_forward.2} parent=0 // loop_footer_branch
    %14 = sbr.rel target = $region3
  $region8: #{moe_block_forward.2} parent=0 // loop_exit
    _

</llo_original>
